<compile_context>
chip_gen: v7x
topology: tpu7x:2x2x1
jax: 0.10.0
libtpu: 0.0.40
codegen_flags: <defaults>
</compile_context>

<pallas_src>
import functools
import numpy as np
import jax
import jax.numpy as jnp
from jax import lax
from jax.experimental import pallas as pl
from jax.experimental.pallas import tpu as pltpu


# ----------------------------------------------------------------------------
# Deterministic parameter construction (replicates init_fourier_ from PyTorch)
# ----------------------------------------------------------------------------
def make_fourier_weight(N, nch_in=2, kernel_size=1, norm="ortho"):
    """Conv2d weight of shape (2*N, nch_in, N, kernel_size), IFT-initialised."""
    assert nch_in == 2, "Fourier init requires 2 input channels (real/imag)"
    k = np.arange(N)[:, None].astype(np.float64)
    n = np.arange(N)[None, :].astype(np.float64)
    ang = 2.0 * np.pi * n * k / N
    w = np.zeros((2 * N, nch_in, N, kernel_size), dtype=np.float64)
    mid = kernel_size // 2
    w[:N, 0, :, mid] = np.cos(ang)
    w[:N, 1, :, mid] = -np.sin(ang)
    w[N:, 0, :, mid] = np.sin(ang)
    w[N:, 1, :, mid] = np.cos(ang)
    if norm == "ortho":
        w = w / np.sqrt(N)
    return jnp.asarray(w, dtype=jnp.float32)


# ----------------------------------------------------------------------------
# Small in-kernel helpers
# ----------------------------------------------------------------------------
def _apply_nl(v, nl):
    if nl is None:
        return v
    if nl == "tanh":
        return jnp.tanh(v)
    if nl == "relu":
        return jnp.maximum(v, 0.0)
    if nl == "sigmoid":
        return jax.nn.sigmoid(v)
    raise ValueError(f"unsupported nl: {nl}")


def _mxu_dot(a, b):
    """MXU matmul with f32 accumulation.  For f32 operands use full-f32
    contract precision so the kernel matches the PyTorch module numerics;
    bf16 operands take the native bf16 MXU path."""
    prec = (lax.Precision.HIGHEST
            if a.dtype == jnp.float32 and b.dtype == jnp.float32 else None)
    return jnp.dot(a, b, precision=prec, preferred_element_type=jnp.float32)


# ----------------------------------------------------------------------------
# Pallas kernel: one batch tile per grid step, both transforms fused.
# ----------------------------------------------------------------------------
def _gift2_kernel(x_ref, w1_ref, w2t_ref, o_ref, h_ref, hperm_ref, *,
                  bt, nch_int, nrow, ncol, nl):
    # ---- transform 1: one MXU matmul, result streamed to f32 VMEM scratch --
    # h[(ci,r), (b,w)] = W1m @ x_tile
    h_ref[...] = _mxu_dot(w1_ref[...], x_ref[...])

    # ---- permute + fused nonlinearity + cast --------------------------------
    # hperm[(b,r), (ci,w)] = nl(h[(ci,r), (b,w)]).
    # One lane-dense (nrow, nch_int*ncol) store per batch element: the nch_int
    # source blocks are concatenated along lanes before the store, so every
    # store is full-width and the live value set is a single block.
    for b in range(bt):
        blk = jnp.concatenate(
            [h_ref[ci * nrow:(ci + 1) * nrow, b * ncol:(b + 1) * ncol]
             for ci in range(nch_int)],
            axis=-1)
        blk = _apply_nl(blk, nl)                       # elementwise, f32
        hperm_ref[b * nrow:(b + 1) * nrow, :] = blk.astype(hperm_ref.dtype)

    # ---- transform 2: one MXU matmul, output already lane-dense -------------
    # y[(b,r), (co,m)] = H_perm @ W2m^T  ==  out[b, co, r, m]
    y = _mxu_dot(hperm_ref[...], w2t_ref[...].astype(hperm_ref.dtype))
    o_ref[...] = y.astype(o_ref.dtype)


# ----------------------------------------------------------------------------
# Generation-aware sizing heuristics
# ----------------------------------------------------------------------------
def _chip_params():
    """(vmem_capacity_bytes, n_tensorcores, mxu_lane_align) — best-effort
    query; falls back to v5e/v6e-like defaults if unavailable."""
    vmem_cap = 128 * 1024 * 1024
    num_tc = 1
    lane_align = 256
    try:
        info = pltpu.get_tpu_info()
        vmem_cap = int(getattr(info, "vmem_capacity_bytes", vmem_cap))
    except Exception:
        pass
    try:
        kind = jax.devices()[0].device_kind.lower()
        if "v5 lite" in kind or "v5e" in kind or "v5litepod" in kind:
            lane_align = 128           # v5e MXU tiles at 128x128
        if "7" in kind:
            num_tc = 2                 # v7x: 2 TensorCores per chip
    except Exception:
        pass
    if vmem_cap <= 64 * 1024 * 1024:   # 64 MiB per-core VMEM => v7x-class chip
        num_tc = 2
    return vmem_cap, num_tc, lane_align


def _pick_batch_tile(B, nrow, ncol, step_bytes, budget, lane_align, num_tc,
                     sub_align):
    """Pick bt (divides B) so the transform-1 matmul N dim (bt*ncol) is >= 512
    and lane-aligned where possible, under a per-step VMEM budget.  bt == B
    (a full-extent block) is always layout-legal."""
    divisors = [d for d in range(1, B + 1) if B % d == 0]
    legal = [d for d in divisors
             if d == B or ((d * ncol) % 128 == 0 and (d * nrow) % sub_align == 0)]
    fits = [d for d in legal if step_bytes(d) <= budget] or [min(legal)]
    pref = [d for d in fits if d * ncol >= 512 and (d * ncol) % lane_align == 0]
    bt = min(pref) if pref else max(fits)
    # Megacore cap only where it buys real parallelism (2-TC chips), and only
    # if it does not drop the matmul N dim below the 512 target.
    if num_tc > 1 and bt * num_tc > B:
        alt = [d for d in fits if d * num_tc <= B and d * ncol >= 512]
        if alt:
            bt = max(alt)
    return bt


# ----------------------------------------------------------------------------
# Wrapper
# ----------------------------------------------------------------------------
def generalised_ift2(x, w1, w2, *, nl=None, compute_dtype=jnp.float32,
                     intermediate_dtype=None, out_dtype=None,
                     batch_tile=None, single_buffer_weights=False,
                     interpret=False):
    """x: (B, nch_in, nrow, ncol) NCHW.  w1/w2: PyTorch Conv2d weight shapes
    (nch_int*nrow, nch_in, nrow, 1) and (nch_out*ncol, nch_int, ncol, 1).

    Returns (B, nch_out, nrow, ncol), matching GeneralisedIFT2Layer.forward
    with the module defaults (kernel_size=1, bias=False, batch_norm=False).

    compute_dtype       dtype of the matmul inputs as DMA'd from HBM (x and
                        both weights).  bf16 halves HBM bytes (the kernel is
                        HBM-bound on v7x at fastMRI sizes) and raises MXU
                        throughput; accumulation is always f32.
    intermediate_dtype  dtype of the intermediate between the two transforms
                        (default: compute_dtype).  Keep it f32 on the bf16
                        path to avoid re-quantising between the two IFTs.
    single_buffer_weights  optional v7x VMEM saving: the constant-index weight
                        blocks are DMA'd once anyway, this also drops their 2x
                        double-buffer reservation (pl.Buffered(1)).
    """
    B, nch_in, nrow, ncol = x.shape
    nch_int = w1.shape[0] // nrow
    nch_out = w2.shape[0] // ncol
    ks1, ks2 = w1.shape[-1], w2.shape[-1]
    # TODO(synk): only kernel_size == 1 (the module default) is implemented;
    # the width-wise conv taps for kernel_size > 1 are not translated here.
    assert ks1 == 1 and ks2 == 1
    # TODO(synk): bias=True and batch_norm=True paths are not implemented
    # (module defaults are bias=False, batch_norm=False).
    assert w1.shape == (nch_int * nrow, nch_in, nrow, ks1)
    assert w2.shape == (nch_out * ncol, nch_int, ncol, ks2)
    if nl not in (None, "tanh", "relu", "sigmoid"):
        raise ValueError(f"unsupported nl: {nl}")

    if intermediate_dtype is None:
        intermediate_dtype = compute_dtype
    if out_dtype is None:
        out_dtype = x.dtype

    cbytes = jnp.dtype(compute_dtype).itemsize
    ibytes = jnp.dtype(intermediate_dtype).itemsize
    obytes = jnp.dtype(out_dtype).itemsize

    # ---- one-off layout plumbing in plain JAX (outside the kernel) ----------
    # W1m[(ci,r), (cin,n)],  W2m^T[(ci,w), (co,m)]  (pre-transposed so
    # transform 2 needs no in-kernel transpose), and
    # x2[(cin,n), (b,w)]     (pre-transposed so transform 1's RHS is a plain
    # column tile -> no in-kernel copy loop, no masked stores, no xcat scratch)
    w1m = w1[..., 0].reshape(nch_int * nrow, nch_in * nrow).astype(compute_dtype)
    w2t = (w2[..., 0].reshape(nch_out * ncol, nch_int * ncol).T
           .astype(compute_dtype))
    x2 = (x.reshape(B, nch_in * nrow, ncol).transpose(1, 0, 2)
          .reshape(nch_in * nrow, B * ncol).astype(compute_dtype))

    # ---- generation-aware tiling & VMEM budget -------------------------------
    vmem_cap, num_tc, lane_align = _chip_params()
    sub_align = 8 if obytes >= 4 else 16              # packed sublane tiling

    def step_bytes(bt):  # per-grid-step VMEM use, excluding the weights
        x_blk = 2 * nch_in * nrow * bt * ncol * cbytes      # double-buffered in
        o_blk = 2 * bt * nrow * nch_out * ncol * obytes     # double-buffered out
        h_scr = nch_int * nrow * bt * ncol * 4              # f32 scratch
        hp_scr = bt * nrow * nch_int * ncol * ibytes        # permuted scratch
        return x_blk + o_blk + h_scr + hp_scr

    budget = max(4 * 1024 * 1024, vmem_cap // 8)      # ~16 MiB v5e/v6e, 8 MiB v7x
    if batch_tile is None:
        bt = _pick_batch_tile(B, nrow, ncol, step_bytes, budget, lane_align,
                              num_tc, sub_align)
    else:
        bt = batch_tile
        assert B % bt == 0

    wbuf = 1 if single_buffer_weights else 2
    w_bytes = (w1m.size + w2t.size) * cbytes
    vmem_need = wbuf * w_bytes + step_bytes(bt) + (4 << 20)       # +headroom
    vmem_limit = int(min(max(vmem_need, 32 << 20), int(0.8 * vmem_cap)))

    # Advisory cost so XLA overlaps the surrounding reshapes with the kernel.
    flops = (2 * (nch_int * nrow) * (nch_in * nrow) * (B * ncol)
             + 2 * (B * nrow) * (nch_int * ncol) * (nch_out * ncol))
    transcendentals = B * nch_int * nrow * ncol if nl in ("tanh", "sigmoid") else 0
    bytes_accessed = ((x2.size + w1m.size + w2t.size) * cbytes
                      + B * nrow * nch_out * ncol * obytes)
    cost = pl.CostEstimate(flops=flops, transcendentals=transcendentals,
                           bytes_accessed=bytes_accessed)

    # Weight specs: constant index map (DMA'd once).  Optionally drop the 2x
    # double-buffer VMEM reservation (useful on v7x's 64 MiB VMEM).
    if single_buffer_weights:
        w1_spec = pl.BlockSpec((nch_int * nrow, nch_in * nrow),
                               lambda i: (0, 0), pipeline_mode=pl.Buffered(1))
        w2_spec = pl.BlockSpec((nch_int * ncol, nch_out * ncol),
                               lambda i: (0, 0), pipeline_mode=pl.Buffered(1))
    else:
        w1_spec = pl.BlockSpec((nch_int * nrow, nch_in * nrow), lambda i: (0, 0))
        w2_spec = pl.BlockSpec((nch_int * ncol, nch_out * ncol), lambda i: (0, 0))

    kernel = functools.partial(_gift2_kernel, bt=bt, nch_int=nch_int,
                               nrow=nrow, ncol=ncol, nl=nl)

    y_flat = pl.pallas_call(
        kernel,
        out_shape=jax.ShapeDtypeStruct((B * nrow, nch_out * ncol), out_dtype),
        grid_spec=pltpu.PrefetchScalarGridSpec(
            num_scalar_prefetch=0,
            grid=(B // bt,),
            in_specs=[
                # x2 column tile: (nch_in*nrow, bt*ncol) at block column i
                pl.BlockSpec((nch_in * nrow, bt * ncol), lambda i: (0, i)),
                w1_spec,
                w2_spec,
            ],
            out_specs=pl.BlockSpec((bt * nrow, nch_out * ncol),
                                   lambda i: (i, 0)),
            scratch_shapes=[
                pltpu.VMEM((nch_int * nrow, bt * ncol), jnp.float32),        # h
                pltpu.VMEM((bt * nrow, nch_int * ncol), intermediate_dtype), # H_perm
            ],
        ),
        compiler_params=pltpu.CompilerParams(
            dimension_semantics=("parallel",),
            vmem_limit_bytes=vmem_limit),
        cost_estimate=cost,
        interpret=interpret,
    )(x2, w1m, w2t)

    # Layout plumbing back to NCHW (outside the kernel, overlapped by XLA).
    return y_flat.reshape(B, nrow, nch_out, ncol).transpose(0, 2, 1, 3)


# ----------------------------------------------------------------------------
# Pure-JAX reference (direct transcription of the PyTorch forward)
# ----------------------------------------------------------------------------
def reference_forward(x, w1, w2, nrow, ncol, nch_int, nch_out, nl=None):
    B = x.shape[0]
    hp = lax.Precision.HIGHEST
    h = jnp.einsum("ocn,bcnw->bow", w1[..., 0], x, precision=hp)     # idft1 (ks=1)
    h = h.reshape(B, nch_int, nrow, ncol).transpose(0, 1, 3, 2)      # reshape+permute
    if nl == "tanh":
        h = jnp.tanh(h)
    elif nl == "relu":
        h = jnp.maximum(h, 0.0)
    elif nl == "sigmoid":
        h = jax.nn.sigmoid(h)
    y = jnp.einsum("ocw,bcwr->bor", w2[..., 0], h, precision=hp)     # idft2 (ks=1)
    y = y.reshape(B, nch_out, ncol, nrow).transpose(0, 1, 3, 2)
    return y


if __name__ == "__main__":
    # Module config: nrow=ncol=16, nch_in=nch_int=nch_out=2, kernel_size=1,
    # init_fourier=True, bias=False, batch_norm=False (module defaults).
    # NOTE: correctness-only shapes — output lane width 32 < 128, so this
    # config says nothing about performance (benchmark at production sizes).
    B, NCH, NROW, NCOL = 4, 2, 16, 16

    key = jax.random.PRNGKey(0)
    x = jax.random.normal(key, (B, NCH, NROW, NCOL), dtype=jnp.float32)

    w1 = make_fourier_weight(NROW, nch_in=NCH, kernel_size=1)   # (2*nrow, 2, nrow, 1)
    w2 = make_fourier_weight(NCOL, nch_in=NCH, kernel_size=1)   # (2*ncol, 2, ncol, 1)

    # --- f32 path, no nonlinearity (module numerics) -------------------------
    ref = reference_forward(x, w1, w2, NROW, NCOL, NCH, NCH, nl=None)
    out = jax.block_until_ready(generalised_ift2(x, w1, w2, nl=None))
    assert out.shape == (B, NCH, NROW, NCOL)
    np.testing.assert_allclose(np.asarray(out), np.asarray(ref),
                               rtol=1e-4, atol=1e-4)

    # --- f32 path with tanh fused between the two transforms -----------------
    ref_t = reference_forward(x, w1, w2, NROW, NCOL, NCH, NCH, nl="tanh")
    out_t = jax.block_until_ready(generalised_ift2(x, w1, w2, nl="tanh"))
    np.testing.assert_allclose(np.asarray(out_t), np.asarray(ref_t),
                               rtol=1e-4, atol=1e-4)

    # --- bf16 DMA/compute path (f32 accumulation, f32 intermediate) ----------
    # Activations + weights are DMA'd as bf16 (half the HBM bytes); keeping
    # the intermediate in f32 avoids re-quantising between the two IFTs.
    out_bf16 = jax.block_until_ready(
        generalised_ift2(x, w1, w2, nl=None, compute_dtype=jnp.bfloat16,
                         intermediate_dtype=jnp.float32))
    np.testing.assert_allclose(np.asarray(out_bf16), np.asarray(ref),
                               rtol=5e-2, atol=5e-2)

    # --- multi-grid-step path (bt < B): exercises the column-tiled x input ---
    NROW2 = NCOL2 = 64
    x_big = jax.random.normal(jax.random.PRNGKey(1), (B, NCH, NROW2, NCOL2),
                              dtype=jnp.float32)
    w1b = make_fourier_weight(NROW2, nch_in=NCH, kernel_size=1)
    w2b = make_fourier_weight(NCOL2, nch_in=NCH, kernel_size=1)
    ref_b = reference_forward(x_big, w1b, w2b, NROW2, NCOL2, NCH, NCH, nl=None)
    out_b = jax.block_until_ready(
        generalised_ift2(x_big, w1b, w2b, nl=None, batch_tile=2))
    np.testing.assert_allclose(np.asarray(out_b), np.asarray(ref_b),
                               rtol=1e-4, atol=1e-4)

    print("KERNEL_OK")
</pallas_src>

<mosaic_0001>
module attributes {stable_mosaic.version = 11 : i64} {
  func.func @_gift2_kernel(%arg0: i32, %arg1: memref<32x64xf32, #tpu.memory_space<vmem>>, %arg2: memref<32x32xf32, #tpu.memory_space<vmem>>, %arg3: memref<32x32xf32, #tpu.memory_space<vmem>>, %arg4: memref<64x32xf32, #tpu.memory_space<vmem>>, %arg5: memref<32x64xf32, #tpu.memory_space<vmem>>, %arg6: memref<64x32xf32, #tpu.memory_space<vmem>>) attributes {dimension_semantics = [#tpu.dimension_semantics<parallel>], iteration_bounds = array<i64: 1>, scalar_prefetch = 0 : i64, scratch_operands = 2 : i64, tpu.core_type = #tpu.core_type<tc>, window_params = [{transform_indices = @transform_0, window_bounds = array<i64: 32, 64>}, {pipeline_mode = #tpu.pipeline_mode<synchronous>, transform_indices = @transform_1, window_bounds = array<i64: 32, 32>}, {pipeline_mode = #tpu.pipeline_mode<synchronous>, transform_indices = @transform_2, window_bounds = array<i64: 32, 32>}, {transform_indices = @transform_3, window_bounds = array<i64: 64, 32>}]} {
    %c0 = arith.constant 0 : index
    %c0_0 = arith.constant 0 : index
    %0 = vector.load %arg2[%c0, %c0_0] : memref<32x32xf32, #tpu.memory_space<vmem>>, vector<32x32xf32>
    %c0_1 = arith.constant 0 : index
    %c0_2 = arith.constant 0 : index
    %1 = vector.load %arg1[%c0_1, %c0_2] : memref<32x64xf32, #tpu.memory_space<vmem>>, vector<32x64xf32>
    %cst = arith.constant dense<0.000000e+00> : vector<32x64xf32>
    %2 = tpu.matmul %0, %1, %cst {dimension_numbers = #tpu.dot_dimension_numbers<[1], [0], [0], [1], [0, 0, 1, 1], [], []>, precision = #tpu.contract_precision<fp32>} : vector<32x32xf32>, vector<32x64xf32>, vector<32x64xf32> -> vector<32x64xf32>
    %c0_3 = arith.constant 0 : index
    %c0_4 = arith.constant 0 : index
    %3 = vector.load %arg5[%c0_3, %c0_4] : memref<32x64xf32, #tpu.memory_space<vmem>>, vector<32x64xf32>
    tpu.vector_store %arg5[%c0_3, %c0_4], %2 {strides = array<i32>} : memref<32x64xf32, #tpu.memory_space<vmem>>, vector<32x64xf32>,
    %c0_5 = arith.constant 0 : index
    %c0_6 = arith.constant 0 : index
    %4 = vector.load %arg5[%c0_5, %c0_6] : memref<32x64xf32, #tpu.memory_space<vmem>>, vector<16x16xf32>
    %c16 = arith.constant 16 : index
    %c0_7 = arith.constant 0 : index
    %5 = vector.load %arg5[%c16, %c0_7] : memref<32x64xf32, #tpu.memory_space<vmem>>, vector<16x16xf32>
    %6 = tpu.concatenate %4, %5 in 1 : vector<16x16xf32>, vector<16x16xf32> -> vector<16x32xf32>
    %c0_8 = arith.constant 0 : index
    %c0_9 = arith.constant 0 : index
    %7 = vector.load %arg6[%c0_8, %c0_9] : memref<64x32xf32, #tpu.memory_space<vmem>>, vector<16x32xf32>
    tpu.vector_store %arg6[%c0_8, %c0_9], %6 {strides = array<i32>} : memref<64x32xf32, #tpu.memory_space<vmem>>, vector<16x32xf32>,
    %c0_10 = arith.constant 0 : index
    %c16_11 = arith.constant 16 : index
    %8 = vector.load %arg5[%c0_10, %c16_11] : memref<32x64xf32, #tpu.memory_space<vmem>>, vector<16x16xf32>
    %c16_12 = arith.constant 16 : index
    %c16_13 = arith.constant 16 : index
    %9 = vector.load %arg5[%c16_12, %c16_13] : memref<32x64xf32, #tpu.memory_space<vmem>>, vector<16x16xf32>
    %10 = tpu.concatenate %8, %9 in 1 : vector<16x16xf32>, vector<16x16xf32> -> vector<16x32xf32>
    %c16_14 = arith.constant 16 : index
    %c0_15 = arith.constant 0 : index
    %11 = vector.load %arg6[%c16_14, %c0_15] : memref<64x32xf32, #tpu.memory_space<vmem>>, vector<16x32xf32>
    tpu.vector_store %arg6[%c16_14, %c0_15], %10 {strides = array<i32>} : memref<64x32xf32, #tpu.memory_space<vmem>>, vector<16x32xf32>,
    %c0_16 = arith.constant 0 : index
    %c32 = arith.constant 32 : index
    %12 = vector.load %arg5[%c0_16, %c32] : memref<32x64xf32, #tpu.memory_space<vmem>>, vector<16x16xf32>
    %c16_17 = arith.constant 16 : index
    %c32_18 = arith.constant 32 : index
    %13 = vector.load %arg5[%c16_17, %c32_18] : memref<32x64xf32, #tpu.memory_space<vmem>>, vector<16x16xf32>
    %14 = tpu.concatenate %12, %13 in 1 : vector<16x16xf32>, vector<16x16xf32> -> vector<16x32xf32>
    %c32_19 = arith.constant 32 : index
    %c0_20 = arith.constant 0 : index
    %15 = vector.load %arg6[%c32_19, %c0_20] : memref<64x32xf32, #tpu.memory_space<vmem>>, vector<16x32xf32>
    tpu.vector_store %arg6[%c32_19, %c0_20], %14 {strides = array<i32>} : memref<64x32xf32, #tpu.memory_space<vmem>>, vector<16x32xf32>,
    %c0_21 = arith.constant 0 : index
    %c48 = arith.constant 48 : index
    %16 = vector.load %arg5[%c0_21, %c48] : memref<32x64xf32, #tpu.memory_space<vmem>>, vector<16x16xf32>
    %c16_22 = arith.constant 16 : index
    %c48_23 = arith.constant 48 : index
    %17 = vector.load %arg5[%c16_22, %c48_23] : memref<32x64xf32, #tpu.memory_space<vmem>>, vector<16x16xf32>
    %18 = tpu.concatenate %16, %17 in 1 : vector<16x16xf32>, vector<16x16xf32> -> vector<16x32xf32>
    %c48_24 = arith.constant 48 : index
    %c0_25 = arith.constant 0 : index
    %19 = vector.load %arg6[%c48_24, %c0_25] : memref<64x32xf32, #tpu.memory_space<vmem>>, vector<16x32xf32>
    tpu.vector_store %arg6[%c48_24, %c0_25], %18 {strides = array<i32>} : memref<64x32xf32, #tpu.memory_space<vmem>>, vector<16x32xf32>,
    %c0_26 = arith.constant 0 : index
    %c0_27 = arith.constant 0 : index
    %20 = vector.load %arg6[%c0_26, %c0_27] : memref<64x32xf32, #tpu.memory_space<vmem>>, vector<64x32xf32>
    %c0_28 = arith.constant 0 : index
    %c0_29 = arith.constant 0 : index
    %21 = vector.load %arg3[%c0_28, %c0_29] : memref<32x32xf32, #tpu.memory_space<vmem>>, vector<32x32xf32>
    %cst_30 = arith.constant dense<0.000000e+00> : vector<64x32xf32>
    %22 = tpu.matmul %20, %21, %cst_30 {dimension_numbers = #tpu.dot_dimension_numbers<[1], [0], [0], [1], [0, 0, 1, 1], [], []>, precision = #tpu.contract_precision<fp32>} : vector<64x32xf32>, vector<32x32xf32>, vector<64x32xf32> -> vector<64x32xf32>
    %c0_31 = arith.constant 0 : index
    %c0_32 = arith.constant 0 : index
    %23 = vector.load %arg4[%c0_31, %c0_32] : memref<64x32xf32, #tpu.memory_space<vmem>>, vector<64x32xf32>
    tpu.vector_store %arg4[%c0_31, %c0_32], %22 {strides = array<i32>} : memref<64x32xf32, #tpu.memory_space<vmem>>, vector<64x32xf32>,
    return
  }
  func.func @transform_0(%arg0: i32) -> (i32, i32) {
    %c0_i32 = arith.constant 0 : i32
    %c0_i32_0 = arith.constant 0 : i32
    return %c0_i32, %arg0 : i32, i32
  }
  func.func @transform_1(%arg0: i32) -> (i32, i32) {
    %c0_i32 = arith.constant 0 : i32
    %c0_i32_0 = arith.constant 0 : i32
    %c0_i32_1 = arith.constant 0 : i32
    return %c0_i32, %c0_i32_0 : i32, i32
  }
  func.func @transform_2(%arg0: i32) -> (i32, i32) {
    %c0_i32 = arith.constant 0 : i32
    %c0_i32_0 = arith.constant 0 : i32
    %c0_i32_1 = arith.constant 0 : i32
    return %c0_i32, %c0_i32_0 : i32, i32
  }
  func.func @transform_3(%arg0: i32) -> (i32, i32) {
    %c0_i32 = arith.constant 0 : i32
    %c0_i32_0 = arith.constant 0 : i32
    return %arg0, %c0_i32 : i32, i32
  }
}

</mosaic_0001>

<llo_original>
// kernel: tpu_custom_call.1
$region0: #{tpu_custom_call.1}
  #allocation0 [shape = 'u32[]', space=smem, size = 0x4, offset = 0x4, fixed_abs, tag = 'smem constant byte address 0x4 - core index']
  #allocation1 [shape = 'u32[144,128]{1,0:T(1,128)}', space=vmem, size = 0x12000, scoped, tag = 'internal scratch']
  #allocation2 [shape = 'f32[32,64]{1,0:T(8,128)}', space=vmem, size = 0x4000, scoped, tag = 'scratch operand']
  #allocation3 [shape = 'f32[64,32]{1,0:T(8,128)}', space=vmem, size = 0x8000, scoped, tag = 'scratch operand']
  %s0 = inlined_call_operand.hbm [shape: f32[32,64], index: 0, kind: input, shape index: {}]
  %s1 = inlined_call_operand.hbm [shape: f32[32,32], index: 1, kind: input, shape index: {}]
  %s2 = inlined_call_operand.hbm [shape: f32[32,32], index: 2, kind: input, shape index: {}]
  %s3 = inlined_call_operand.vmem [shape: f32[64,32], index: 3, kind: output, shape index: {}]
  %s4 = sld [smem:[#allocation0]]
  $region34: #{tpu_custom_call.1} parent=0
    _
  %s6 = ssub.s32 1, %s4
  %s7 = scalar_select 0, %s6, %s4
  $region1: #{tpu_custom_call.1} parent=0
    #allocation4 [shape = 'u8[16384]{0}', space=vmem, size = 0x4000, scoped, tag = 'input window, operand 0, single buffered']
    #allocation5 [shape = 's32[1]{0}', space=sflag, size = 0x4, scoped, tag = 'scoped memory for tpu_custom_call.1']
    #allocation6 [shape = 'u8[16384]{0}', space=vmem, size = 0x4000, scoped, tag = 'input window, operand 1, single buffered']
    #allocation7 [shape = 's32[1]{0}', space=sflag, size = 0x4, scoped, tag = 'scoped memory for tpu_custom_call.1']
    #allocation8 [shape = 'u8[16384]{0}', space=vmem, size = 0x4000, scoped, tag = 'input window, operand 2, single buffered']
    %8 = vsyncpa [#allocation5], 0
    %9 = vsyncpa [#allocation7], 0
    // Predicated region
    $region2: #{tpu_custom_call.1} parent=1 // pred_check
      _
    $region3: #{tpu_custom_call.1} parent=1 // pred_check_branch
      %11 = sbr.rel (0) target = $region5
    $region4: #{tpu_custom_call.1} parent=1 // pred_region
      %s13 = ssub.s32 512, 512
      %14 = vsyncadd [#allocation5], %s13
      %s15 = sshll.u32 [#allocation4], 4
      %s16 = int_to_ptr.vmem [resolvable:$true] %s15
      %21 = dma.hbm_to_vmem [thread:$0]  %s0, 512, %s16, [#allocation5], 128, 128, 8
    $region5: #{tpu_custom_call.1} parent=1 // pred_fallthru
      _
    // Predicated region
    $region6: #{tpu_custom_call.1} parent=1 // pred_check
      _
    $region7: #{tpu_custom_call.1} parent=1 // pred_check_branch
      %23 = sbr.rel (0) target = $region9
    $region8: #{tpu_custom_call.1} parent=1 // pred_region
      %s25 = ssub.s32 512, 512
      %26 = vsyncadd [#allocation7], %s25
      %s27 = sshll.u32 [#allocation6], 4
      %s28 = int_to_ptr.vmem [resolvable:$true] %s27
      %33 = dma.hbm_to_vmem [thread:$0]  %s1, 512, %s28, [#allocation7], 128, 128, 8
    $region9: #{tpu_custom_call.1} parent=1 // pred_fallthru
      _
    // Predicated region
    $region10: #{tpu_custom_call.1} parent=1 // pred_check
      _
    $region11: #{tpu_custom_call.1} parent=1 // pred_check_branch
      %35 = sbr.rel (0) target = $region13
    $region12: #{tpu_custom_call.1} parent=1 // pred_region
      %s37 = ssub.s32 512, 512
      %38 = vsyncadd [#allocation7], %s37
      %s39 = sshll.u32 [#allocation8], 4
      %s40 = int_to_ptr.vmem [resolvable:$true] %s39
      %45 = dma.hbm_to_vmem [thread:$0]  %s2, 512, %s40, [#allocation7], 128, 128, 8
    $region13: #{tpu_custom_call.1} parent=1 // pred_fallthru
      _
    // Predicated region
    $region14: #{tpu_custom_call.1} parent=1 // pred_check
      _
    $region15: #{tpu_custom_call.1} parent=1 // pred_check_branch
      %47 = sbr.rel (0) target = $region17
    $region16: #{tpu_custom_call.1} parent=1 // pred_region
      %48 = dma.done [#allocation5], 512
    $region17: #{tpu_custom_call.1} parent=1 // pred_fallthru
      _
    // Predicated region
    $region18: #{tpu_custom_call.1} parent=1 // pred_check
      _
    $region19: #{tpu_custom_call.1} parent=1 // pred_check_branch
      %50 = sbr.rel (0) target = $region21
    $region20: #{tpu_custom_call.1} parent=1 // pred_region
      %51 = dma.done [#allocation7], 512
    $region21: #{tpu_custom_call.1} parent=1 // pred_fallthru
      _
    // Predicated region
    $region22: #{tpu_custom_call.1} parent=1 // pred_check
      _
    $region23: #{tpu_custom_call.1} parent=1 // pred_check_branch
      %53 = sbr.rel (0) target = $region25
    $region24: #{tpu_custom_call.1} parent=1 // pred_region
      %54 = dma.done [#allocation7], 512
    $region25: #{tpu_custom_call.1} parent=1 // pred_fallthru
      _
    %v55 = vld [vmem:[#allocation6] sm:$0xff]
    %v56 = vld [vmem:[#allocation6 + $0x8] sm:$0xff]
    %v57 = vld [vmem:[#allocation6 + $0x10] sm:$0xff]
    %v58 = vld [vmem:[#allocation6 + $0x18] sm:$0xff]
    %v59 = vld [vmem:[#allocation4] sm:$0xff]
    %v60 = vld [vmem:[#allocation4 + $0x8] sm:$0xff]
    %v61 = vld [vmem:[#allocation4 + $0x10] sm:$0xff]
    %v62 = vld [vmem:[#allocation4 + $0x18] sm:$0xff]
    %vm63 = vcmask 261120
    %v65 = vsel %vm63, %v55, 0
    %v68 = vsel %vm63, %v56, 0
    %v71 = vsel %vm63, %v57, 0
    %v74 = vsel %vm63, %v58, 0
    %76 = vmatprep.subr.mxu0 0.0
    %v77 = vand.u32 %v59, 4294901760
    %78 = vmatpush1.msra.mxu0 %v77
    %79 = vmatprep.subr.mxu0 0.0
    %v80 = vand.u32 %v60, 4294901760
    %81 = vmatpush1.msra.mxu0 %v80
    %82 = vmatprep.subr.mxu0 0.0
    %v83 = vand.u32 %v61, 4294901760
    %84 = vmatpush1.msra.mxu0 %v83
    %85 = vmatprep.subr.mxu0 0.0
    %v86 = vand.u32 %v62, 4294901760
    %87 = vmatpush1.msra.mxu0 %v86
    %88 = vmatprep.subr.mxu0 0.0
    %89 = vmatpush1.msra.mxu0 0.0
    %90 = vmatprep.subr.mxu0 0.0
    %91 = vmatpush1.msra.mxu0 0.0
    %92 = vmatprep.subr.mxu0 0.0
    %93 = vmatpush1.msra.mxu0 0.0
    %94 = vmatprep.subr.mxu0 0.0
    %95 = vmatpush1.msra.mxu0 0.0
    %96 = vmatprep.subr.mxu0 0.0
    %97 = vmatpush1.msra.mxu0 0.0
    %98 = vmatprep.subr.mxu0 0.0
    %99 = vmatpush1.msra.mxu0 0.0
    %100 = vmatprep.subr.mxu0 0.0
    %101 = vmatpush1.msra.mxu0 0.0
    %102 = vmatprep.subr.mxu0 0.0
    %103 = vmatpush1.msra.mxu0 0.0
    %104 = vmatprep.subr.mxu0 0.0
    %105 = vmatpush1.msra.mxu0 0.0
    %106 = vmatprep.subr.mxu0 0.0
    %107 = vmatpush1.msra.mxu0 0.0
    %108 = vmatprep.subr.mxu0 0.0
    %109 = vmatpush1.msra.mxu0 0.0
    %110 = vmatprep.subr.mxu0 0.0
    %111 = vmatpush1.msra.mxu0 0.0
    %112 = vmatprep.subr.mxu0 0.0
    %113 = vmatpush1.msra.mxu0 0.0
    %114 = vmatprep.subr.mxu0 0.0
    %115 = vmatpush1.msra.mxu0 0.0
    %116 = vmatprep.subr.mxu0 0.0
    %117 = vmatpush1.msra.mxu0 0.0
    %118 = vmatprep.subr.mxu0 0.0
    %119 = vmatpush1.msra.mxu0 0.0
    %120 = vmatprep.subr.mxu0 0.0
    %121 = vmatpush1.msra.mxu0 0.0
    %122 = vmatprep.subr.mxu0 0.0
    %123 = vmatpush1.msra.mxu0 0.0
    %124 = vmatprep.subr.mxu0 0.0
    %125 = vmatpush1.msra.mxu0 0.0
    %126 = vmatprep.subr.mxu0 0.0
    %127 = vmatpush1.msra.mxu0 0.0
    %128 = vmatprep.subr.mxu0 0.0
    %129 = vmatpush1.msra.mxu0 0.0
    %130 = vmatprep.subr.mxu0 0.0
    %131 = vmatpush1.msra.mxu0 0.0
    %132 = vmatprep.subr.mxu0 0.0
    %133 = vmatpush1.msra.mxu0 0.0
    %134 = vmatprep.subr.mxu0 0.0
    %135 = vmatpush1.msra.mxu0 0.0
    %136 = vmatprep.subr.mxu0 0.0
    %137 = vmatpush1.msra.mxu0 0.0
    %138 = vmatprep.subr.mxu0 0.0
    %139 = vmatpush1.msra.mxu0 0.0
    %140 = vmatprep.subr.mxu0 0.0
    %141 = vmatpush1.msra.mxu0 0.0
    %142 = vmatprep.subr.mxu0 0.0
    %143 = vmatpush1.msra.mxu0 0.0
    %144 = vmatprep.mubr.f32.mxu0 0.0
    %v145 = vand.u32 %v65, 4294901760
    %v146 = vsub.f32 %v65, %v145
    %v147 = vand.u32 %v146, 4294901760
    %v148 = vsub.f32 %v146, %v147
    %v149 = vand.u32 %v148, 4294901760
    %150 = vmatmul.mubr.f32.gmra.mrb[0].mxu0 %v149
    %v151 = vpop.f32.mrb[0].mxu0
    %v152 = vadd.f32 0.0, %v151
    %v153 = vpop.f32.mrb[0].mxu0
    %154 = vmatprep.mubr.f32.mxu0 0.0
    %v155 = vand.u32 %v68, 4294901760
    %v156 = vsub.f32 %v68, %v155
    %v157 = vand.u32 %v156, 4294901760
    %v158 = vsub.f32 %v156, %v157
    %v159 = vand.u32 %v158, 4294901760
    %160 = vmatmul.mubr.f32.gmra.mrb[0].mxu0 %v159
    %v161 = vpop.f32.mrb[0].mxu0
    %v162 = vadd.f32 0.0, %v161
    %v163 = vpop.f32.mrb[0].mxu0
    %164 = vmatprep.mubr.f32.mxu0 0.0
    %v165 = vand.u32 %v71, 4294901760
    %v166 = vsub.f32 %v71, %v165
    %v167 = vand.u32 %v166, 4294901760
    %v168 = vsub.f32 %v166, %v167
    %v169 = vand.u32 %v168, 4294901760
    %170 = vmatmul.mubr.f32.gmra.mrb[0].mxu0 %v169
    %v171 = vpop.f32.mrb[0].mxu0
    %v172 = vadd.f32 0.0, %v171
    %v173 = vpop.f32.mrb[0].mxu0
    %174 = vmatprep.mubr.f32.mxu0 0.0
    %v175 = vand.u32 %v74, 4294901760
    %v176 = vsub.f32 %v74, %v175
    %v177 = vand.u32 %v176, 4294901760
    %v178 = vsub.f32 %v176, %v177
    %v179 = vand.u32 %v178, 4294901760
    %180 = vmatmul.mubr.f32.gmra.mrb[0].mxu0 %v179
    %v181 = vpop.f32.mrb[0].mxu0
    %v182 = vadd.f32 0.0, %v181
    %v183 = vpop.f32.mrb[0].mxu0
    %184 = vdwg.mxu0
    %185 = vmatprep.subr.mxu0 0.0
    %v186 = vand.u32 %v59, 4294901760
    %v187 = vsub.f32 %v59, %v186
    %v188 = vand.u32 %v187, 4294901760
    %v189 = vsub.f32 %v187, %v188
    %v190 = vand.u32 %v189, 4294901760
    %191 = vmatpush1.msra.mxu0 %v190
    %192 = vmatprep.subr.mxu0 0.0
    %v193 = vand.u32 %v60, 4294901760
    %v194 = vsub.f32 %v60, %v193
    %v195 = vand.u32 %v194, 4294901760
    %v196 = vsub.f32 %v194, %v195
    %v197 = vand.u32 %v196, 4294901760
    %198 = vmatpush1.msra.mxu0 %v197
    %199 = vmatprep.subr.mxu0 0.0
    %v200 = vand.u32 %v61, 4294901760
    %v201 = vsub.f32 %v61, %v200
    %v202 = vand.u32 %v201, 4294901760
    %v203 = vsub.f32 %v201, %v202
    %v204 = vand.u32 %v203, 4294901760
    %205 = vmatpush1.msra.mxu0 %v204
    %206 = vmatprep.subr.mxu0 0.0
    %v207 = vand.u32 %v62, 4294901760
    %v208 = vsub.f32 %v62, %v207
    %v209 = vand.u32 %v208, 4294901760
    %v210 = vsub.f32 %v208, %v209
    %v211 = vand.u32 %v210, 4294901760
    %212 = vmatpush1.msra.mxu0 %v211
    %213 = vmatprep.subr.mxu0 0.0
    %214 = vmatpush1.msra.mxu0 0.0
    %215 = vmatprep.subr.mxu0 0.0
    %216 = vmatpush1.msra.mxu0 0.0
    %217 = vmatprep.subr.mxu0 0.0
    %218 = vmatpush1.msra.mxu0 0.0
    %219 = vmatprep.subr.mxu0 0.0
    %220 = vmatpush1.msra.mxu0 0.0
    %221 = vmatprep.subr.mxu0 0.0
    %222 = vmatpush1.msra.mxu0 0.0
    %223 = vmatprep.subr.mxu0 0.0
    %224 = vmatpush1.msra.mxu0 0.0
    %225 = vmatprep.subr.mxu0 0.0
    %226 = vmatpush1.msra.mxu0 0.0
    %227 = vmatprep.subr.mxu0 0.0
    %228 = vmatpush1.msra.mxu0 0.0
    %229 = vmatprep.subr.mxu0 0.0
    %230 = vmatpush1.msra.mxu0 0.0
    %231 = vmatprep.subr.mxu0 0.0
    %232 = vmatpush1.msra.mxu0 0.0
    %233 = vmatprep.subr.mxu0 0.0
    %234 = vmatpush1.msra.mxu0 0.0
    %235 = vmatprep.subr.mxu0 0.0
    %236 = vmatpush1.msra.mxu0 0.0
    %237 = vmatprep.subr.mxu0 0.0
    %238 = vmatpush1.msra.mxu0 0.0
    %239 = vmatprep.subr.mxu0 0.0
    %240 = vmatpush1.msra.mxu0 0.0
    %241 = vmatprep.subr.mxu0 0.0
    %242 = vmatpush1.msra.mxu0 0.0
    %243 = vmatprep.subr.mxu0 0.0
    %244 = vmatpush1.msra.mxu0 0.0
    %245 = vmatprep.subr.mxu0 0.0
    %246 = vmatpush1.msra.mxu0 0.0
    %247 = vmatprep.subr.mxu0 0.0
    %248 = vmatpush1.msra.mxu0 0.0
    %249 = vmatprep.subr.mxu0 0.0
    %250 = vmatpush1.msra.mxu0 0.0
    %251 = vmatprep.subr.mxu0 0.0
    %252 = vmatpush1.msra.mxu0 0.0
    %253 = vmatprep.subr.mxu0 0.0
    %254 = vmatpush1.msra.mxu0 0.0
    %255 = vmatprep.subr.mxu0 0.0
    %256 = vmatpush1.msra.mxu0 0.0
    %257 = vmatprep.subr.mxu0 0.0
    %258 = vmatpush1.msra.mxu0 0.0
    %259 = vmatprep.subr.mxu0 0.0
    %260 = vmatpush1.msra.mxu0 0.0
    %261 = vmatprep.subr.mxu0 0.0
    %262 = vmatpush1.msra.mxu0 0.0
    %263 = vmatprep.subr.mxu0 0.0
    %264 = vmatpush1.msra.mxu0 0.0
    %265 = vmatprep.subr.mxu0 0.0
    %266 = vmatpush1.msra.mxu0 0.0
    %267 = vmatprep.subr.mxu0 0.0
    %268 = vmatpush1.msra.mxu0 0.0
    %269 = vmatprep.mubr.f32.mxu0 0.0
    %v270 = vand.u32 %v65, 4294901760
    %271 = vmatmul.mubr.f32.gmra.mrb[0].mxu0 %v270
    %v272 = vpop.f32.mrb[0].mxu0
    %v273 = vadd.f32 %v152, %v272
    %v274 = vpop.f32.mrb[0].mxu0
    %275 = vmatprep.mubr.f32.mxu0 0.0
    %v276 = vand.u32 %v68, 4294901760
    %277 = vmatmul.mubr.f32.gmra.mrb[0].mxu0 %v276
    %v278 = vpop.f32.mrb[0].mxu0
    %v279 = vadd.f32 %v162, %v278
    %v280 = vpop.f32.mrb[0].mxu0
    %281 = vmatprep.mubr.f32.mxu0 0.0
    %v282 = vand.u32 %v71, 4294901760
    %283 = vmatmul.mubr.f32.gmra.mrb[0].mxu0 %v282
    %v284 = vpop.f32.mrb[0].mxu0
    %v285 = vadd.f32 %v172, %v284
    %v286 = vpop.f32.mrb[0].mxu0
    %287 = vmatprep.mubr.f32.mxu0 0.0
    %v288 = vand.u32 %v74, 4294901760
    %289 = vmatmul.mubr.f32.gmra.mrb[0].mxu0 %v288
    %v290 = vpop.f32.mrb[0].mxu0
    %v291 = vadd.f32 %v182, %v290
    %v292 = vpop.f32.mrb[0].mxu0
    %293 = vdwg.mxu0
    %294 = vmatprep.subr.mxu0 0.0
    %v295 = vand.u32 %v59, 4294901760
    %v296 = vsub.f32 %v59, %v295
    %297 = vmatpush1.msra.mxu0 %v296
    %298 = vmatprep.subr.mxu0 0.0
    %v299 = vand.u32 %v60, 4294901760
    %v300 = vsub.f32 %v60, %v299
    %301 = vmatpush1.msra.mxu0 %v300
    %302 = vmatprep.subr.mxu0 0.0
    %v303 = vand.u32 %v61, 4294901760
    %v304 = vsub.f32 %v61, %v303
    %305 = vmatpush1.msra.mxu0 %v304
    %306 = vmatprep.subr.mxu0 0.0
    %v307 = vand.u32 %v62, 4294901760
    %v308 = vsub.f32 %v62, %v307
    %309 = vmatpush1.msra.mxu0 %v308
    %310 = vmatprep.subr.mxu0 0.0
    %311 = vmatpush1.msra.mxu0 0.0
    %312 = vmatprep.subr.mxu0 0.0
    %313 = vmatpush1.msra.mxu0 0.0
    %314 = vmatprep.subr.mxu0 0.0
    %315 = vmatpush1.msra.mxu0 0.0
    %316 = vmatprep.subr.mxu0 0.0
    %317 = vmatpush1.msra.mxu0 0.0
    %318 = vmatprep.subr.mxu0 0.0
    %319 = vmatpush1.msra.mxu0 0.0
    %320 = vmatprep.subr.mxu0 0.0
    %321 = vmatpush1.msra.mxu0 0.0
    %322 = vmatprep.subr.mxu0 0.0
    %323 = vmatpush1.msra.mxu0 0.0
    %324 = vmatprep.subr.mxu0 0.0
    %325 = vmatpush1.msra.mxu0 0.0
    %326 = vmatprep.subr.mxu0 0.0
    %327 = vmatpush1.msra.mxu0 0.0
    %328 = vmatprep.subr.mxu0 0.0
    %329 = vmatpush1.msra.mxu0 0.0
    %330 = vmatprep.subr.mxu0 0.0
    %331 = vmatpush1.msra.mxu0 0.0
    %332 = vmatprep.subr.mxu0 0.0
    %333 = vmatpush1.msra.mxu0 0.0
    %334 = vmatprep.subr.mxu0 0.0
    %335 = vmatpush1.msra.mxu0 0.0
    %336 = vmatprep.subr.mxu0 0.0
    %337 = vmatpush1.msra.mxu0 0.0
    %338 = vmatprep.subr.mxu0 0.0
    %339 = vmatpush1.msra.mxu0 0.0
    %340 = vmatprep.subr.mxu0 0.0
    %341 = vmatpush1.msra.mxu0 0.0
    %342 = vmatprep.subr.mxu0 0.0
    %343 = vmatpush1.msra.mxu0 0.0
    %344 = vmatprep.subr.mxu0 0.0
    %345 = vmatpush1.msra.mxu0 0.0
    %346 = vmatprep.subr.mxu0 0.0
    %347 = vmatpush1.msra.mxu0 0.0
    %348 = vmatprep.subr.mxu0 0.0
    %349 = vmatpush1.msra.mxu0 0.0
    %350 = vmatprep.subr.mxu0 0.0
    %351 = vmatpush1.msra.mxu0 0.0
    %352 = vmatprep.subr.mxu0 0.0
    %353 = vmatpush1.msra.mxu0 0.0
    %354 = vmatprep.subr.mxu0 0.0
    %355 = vmatpush1.msra.mxu0 0.0
    %356 = vmatprep.subr.mxu0 0.0
    %357 = vmatpush1.msra.mxu0 0.0
    %358 = vmatprep.subr.mxu0 0.0
    %359 = vmatpush1.msra.mxu0 0.0
    %360 = vmatprep.subr.mxu0 0.0
    %361 = vmatpush1.msra.mxu0 0.0
    %362 = vmatprep.subr.mxu0 0.0
    %363 = vmatpush1.msra.mxu0 0.0
    %364 = vmatprep.subr.mxu0 0.0
    %365 = vmatpush1.msra.mxu0 0.0
    %366 = vmatprep.mubr.f32.mxu0 0.0
    %v367 = vand.u32 %v65, 4294901760
    %v368 = vsub.f32 %v65, %v367
    %369 = vmatmul.mubr.f32.gmra.mrb[0].mxu0 %v368
    %v370 = vpop.f32.mrb[0].mxu0
    %v371 = vadd.f32 %v273, %v370
    %v372 = vpop.f32.mrb[0].mxu0
    %373 = vmatprep.mubr.f32.mxu0 0.0
    %v374 = vand.u32 %v68, 4294901760
    %v375 = vsub.f32 %v68, %v374
    %376 = vmatmul.mubr.f32.gmra.mrb[0].mxu0 %v375
    %v377 = vpop.f32.mrb[0].mxu0
    %v378 = vadd.f32 %v279, %v377
    %v379 = vpop.f32.mrb[0].mxu0
    %380 = vmatprep.mubr.f32.mxu0 0.0
    %v381 = vand.u32 %v71, 4294901760
    %v382 = vsub.f32 %v71, %v381
    %383 = vmatmul.mubr.f32.gmra.mrb[0].mxu0 %v382
    %v384 = vpop.f32.mrb[0].mxu0
    %v385 = vadd.f32 %v285, %v384
    %v386 = vpop.f32.mrb[0].mxu0
    %387 = vmatprep.mubr.f32.mxu0 0.0
    %v388 = vand.u32 %v74, 4294901760
    %v389 = vsub.f32 %v74, %v388
    %390 = vmatmul.mubr.f32.gmra.mrb[0].mxu0 %v389
    %v391 = vpop.f32.mrb[0].mxu0
    %v392 = vadd.f32 %v291, %v391
    %v393 = vpop.f32.mrb[0].mxu0
    %394 = vdwg.mxu0
    %395 = vmatprep.subr.mxu0 0.0
    %v396 = vand.u32 %v59, 4294901760
    %397 = vmatpush1.msra.mxu0 %v396
    %398 = vmatprep.subr.mxu0 0.0
    %v399 = vand.u32 %v60, 4294901760
    %400 = vmatpush1.msra.mxu0 %v399
    %401 = vmatprep.subr.mxu0 0.0
    %v402 = vand.u32 %v61, 4294901760
    %403 = vmatpush1.msra.mxu0 %v402
    %404 = vmatprep.subr.mxu0 0.0
    %v405 = vand.u32 %v62, 4294901760
    %406 = vmatpush1.msra.mxu0 %v405
    %407 = vmatprep.subr.mxu0 0.0
    %408 = vmatpush1.msra.mxu0 0.0
    %409 = vmatprep.subr.mxu0 0.0
    %410 = vmatpush1.msra.mxu0 0.0
    %411 = vmatprep.subr.mxu0 0.0
    %412 = vmatpush1.msra.mxu0 0.0
    %413 = vmatprep.subr.mxu0 0.0
    %414 = vmatpush1.msra.mxu0 0.0
    %415 = vmatprep.subr.mxu0 0.0
    %416 = vmatpush1.msra.mxu0 0.0
    %417 = vmatprep.subr.mxu0 0.0
    %418 = vmatpush1.msra.mxu0 0.0
    %419 = vmatprep.subr.mxu0 0.0
    %420 = vmatpush1.msra.mxu0 0.0
    %421 = vmatprep.subr.mxu0 0.0
    %422 = vmatpush1.msra.mxu0 0.0
    %423 = vmatprep.subr.mxu0 0.0
    %424 = vmatpush1.msra.mxu0 0.0
    %425 = vmatprep.subr.mxu0 0.0
    %426 = vmatpush1.msra.mxu0 0.0
    %427 = vmatprep.subr.mxu0 0.0
    %428 = vmatpush1.msra.mxu0 0.0
    %429 = vmatprep.subr.mxu0 0.0
    %430 = vmatpush1.msra.mxu0 0.0
    %431 = vmatprep.subr.mxu0 0.0
    %432 = vmatpush1.msra.mxu0 0.0
    %433 = vmatprep.subr.mxu0 0.0
    %434 = vmatpush1.msra.mxu0 0.0
    %435 = vmatprep.subr.mxu0 0.0
    %436 = vmatpush1.msra.mxu0 0.0
    %437 = vmatprep.subr.mxu0 0.0
    %438 = vmatpush1.msra.mxu0 0.0
    %439 = vmatprep.subr.mxu0 0.0
    %440 = vmatpush1.msra.mxu0 0.0
    %441 = vmatprep.subr.mxu0 0.0
    %442 = vmatpush1.msra.mxu0 0.0
    %443 = vmatprep.subr.mxu0 0.0
    %444 = vmatpush1.msra.mxu0 0.0
    %445 = vmatprep.subr.mxu0 0.0
    %446 = vmatpush1.msra.mxu0 0.0
    %447 = vmatprep.subr.mxu0 0.0
    %448 = vmatpush1.msra.mxu0 0.0
    %449 = vmatprep.subr.mxu0 0.0
    %450 = vmatpush1.msra.mxu0 0.0
    %451 = vmatprep.subr.mxu0 0.0
    %452 = vmatpush1.msra.mxu0 0.0
    %453 = vmatprep.subr.mxu0 0.0
    %454 = vmatpush1.msra.mxu0 0.0
    %455 = vmatprep.subr.mxu0 0.0
    %456 = vmatpush1.msra.mxu0 0.0
    %457 = vmatprep.subr.mxu0 0.0
    %458 = vmatpush1.msra.mxu0 0.0
    %459 = vmatprep.subr.mxu0 0.0
    %460 = vmatpush1.msra.mxu0 0.0
    %461 = vmatprep.subr.mxu0 0.0
    %462 = vmatpush1.msra.mxu0 0.0
    %463 = vmatprep.mubr.f32.mxu0 0.0
    %v464 = vand.u32 %v65, 4294901760
    %v465 = vsub.f32 %v65, %v464
    %v466 = vand.u32 %v465, 4294901760
    %467 = vmatmul.mubr.f32.gmra.mrb[0].mxu0 %v466
    %v468 = vpop.f32.mrb[0].mxu0
    %v469 = vadd.f32 %v371, %v468
    %v470 = vpop.f32.mrb[0].mxu0
    %471 = vmatprep.mubr.f32.mxu0 0.0
    %v472 = vand.u32 %v68, 4294901760
    %v473 = vsub.f32 %v68, %v472
    %v474 = vand.u32 %v473, 4294901760
    %475 = vmatmul.mubr.f32.gmra.mrb[0].mxu0 %v474
    %v476 = vpop.f32.mrb[0].mxu0
    %v477 = vadd.f32 %v378, %v476
    %v478 = vpop.f32.mrb[0].mxu0
    %479 = vmatprep.mubr.f32.mxu0 0.0
    %v480 = vand.u32 %v71, 4294901760
    %v481 = vsub.f32 %v71, %v480
    %v482 = vand.u32 %v481, 4294901760
    %483 = vmatmul.mubr.f32.gmra.mrb[0].mxu0 %v482
    %v484 = vpop.f32.mrb[0].mxu0
    %v485 = vadd.f32 %v385, %v484
    %v486 = vpop.f32.mrb[0].mxu0
    %487 = vmatprep.mubr.f32.mxu0 0.0
    %v488 = vand.u32 %v74, 4294901760
    %v489 = vsub.f32 %v74, %v488
    %v490 = vand.u32 %v489, 4294901760
    %491 = vmatmul.mubr.f32.gmra.mrb[0].mxu0 %v490
    %v492 = vpop.f32.mrb[0].mxu0
    %v493 = vadd.f32 %v392, %v492
    %v494 = vpop.f32.mrb[0].mxu0
    %495 = vdwg.mxu0
    %496 = vmatprep.subr.mxu0 0.0
    %v497 = vand.u32 %v59, 4294901760
    %v498 = vsub.f32 %v59, %v497
    %v499 = vand.u32 %v498, 4294901760
    %500 = vmatpush1.msra.mxu0 %v499
    %501 = vmatprep.subr.mxu0 0.0
    %v502 = vand.u32 %v60, 4294901760
    %v503 = vsub.f32 %v60, %v502
    %v504 = vand.u32 %v503, 4294901760
    %505 = vmatpush1.msra.mxu0 %v504
    %506 = vmatprep.subr.mxu0 0.0
    %v507 = vand.u32 %v61, 4294901760
    %v508 = vsub.f32 %v61, %v507
    %v509 = vand.u32 %v508, 4294901760
    %510 = vmatpush1.msra.mxu0 %v509
    %511 = vmatprep.subr.mxu0 0.0
    %v512 = vand.u32 %v62, 4294901760
    %v513 = vsub.f32 %v62, %v512
    %v514 = vand.u32 %v513, 4294901760
    %515 = vmatpush1.msra.mxu0 %v514
    %516 = vmatprep.subr.mxu0 0.0
    %517 = vmatpush1.msra.mxu0 0.0
    %518 = vmatprep.subr.mxu0 0.0
    %519 = vmatpush1.msra.mxu0 0.0
    %520 = vmatprep.subr.mxu0 0.0
    %521 = vmatpush1.msra.mxu0 0.0
    %522 = vmatprep.subr.mxu0 0.0
    %523 = vmatpush1.msra.mxu0 0.0
    %524 = vmatprep.subr.mxu0 0.0
    %525 = vmatpush1.msra.mxu0 0.0
    %526 = vmatprep.subr.mxu0 0.0
    %527 = vmatpush1.msra.mxu0 0.0
    %528 = vmatprep.subr.mxu0 0.0
    %529 = vmatpush1.msra.mxu0 0.0
    %530 = vmatprep.subr.mxu0 0.0
    %531 = vmatpush1.msra.mxu0 0.0
    %532 = vmatprep.subr.mxu0 0.0
    %533 = vmatpush1.msra.mxu0 0.0
    %534 = vmatprep.subr.mxu0 0.0
    %535 = vmatpush1.msra.mxu0 0.0
    %536 = vmatprep.subr.mxu0 0.0
    %537 = vmatpush1.msra.mxu0 0.0
    %538 = vmatprep.subr.mxu0 0.0
    %539 = vmatpush1.msra.mxu0 0.0
    %540 = vmatprep.subr.mxu0 0.0
    %541 = vmatpush1.msra.mxu0 0.0
    %542 = vmatprep.subr.mxu0 0.0
    %543 = vmatpush1.msra.mxu0 0.0
    %544 = vmatprep.subr.mxu0 0.0
    %545 = vmatpush1.msra.mxu0 0.0
    %546 = vmatprep.subr.mxu0 0.0
    %547 = vmatpush1.msra.mxu0 0.0
    %548 = vmatprep.subr.mxu0 0.0
    %549 = vmatpush1.msra.mxu0 0.0
    %550 = vmatprep.subr.mxu0 0.0
    %551 = vmatpush1.msra.mxu0 0.0
    %552 = vmatprep.subr.mxu0 0.0
    %553 = vmatpush1.msra.mxu0 0.0
    %554 = vmatprep.subr.mxu0 0.0
    %555 = vmatpush1.msra.mxu0 0.0
    %556 = vmatprep.subr.mxu0 0.0
    %557 = vmatpush1.msra.mxu0 0.0
    %558 = vmatprep.subr.mxu0 0.0
    %559 = vmatpush1.msra.mxu0 0.0
    %560 = vmatprep.subr.mxu0 0.0
    %561 = vmatpush1.msra.mxu0 0.0
    %562 = vmatprep.subr.mxu0 0.0
    %563 = vmatpush1.msra.mxu0 0.0
    %564 = vmatprep.subr.mxu0 0.0
    %565 = vmatpush1.msra.mxu0 0.0
    %566 = vmatprep.subr.mxu0 0.0
    %567 = vmatpush1.msra.mxu0 0.0
    %568 = vmatprep.subr.mxu0 0.0
    %569 = vmatpush1.msra.mxu0 0.0
    %570 = vmatprep.subr.mxu0 0.0
    %571 = vmatpush1.msra.mxu0 0.0
    %572 = vmatprep.mubr.f32.mxu0 0.0
    %v573 = vand.u32 %v65, 4294901760
    %574 = vmatmul.mubr.f32.gmra.mrb[0].mxu0 %v573
    %v575 = vpop.f32.mrb[0].mxu0
    %v576 = vadd.f32 %v469, %v575
    %v577 = vpop.f32.mrb[0].mxu0
    %578 = vmatprep.mubr.f32.mxu0 0.0
    %v579 = vand.u32 %v68, 4294901760
    %580 = vmatmul.mubr.f32.gmra.mrb[0].mxu0 %v579
    %v581 = vpop.f32.mrb[0].mxu0
    %v582 = vadd.f32 %v477, %v581
    %v583 = vpop.f32.mrb[0].mxu0
    %584 = vmatprep.mubr.f32.mxu0 0.0
    %v585 = vand.u32 %v71, 4294901760
    %586 = vmatmul.mubr.f32.gmra.mrb[0].mxu0 %v585
    %v587 = vpop.f32.mrb[0].mxu0
    %v588 = vadd.f32 %v485, %v587
    %v589 = vpop.f32.mrb[0].mxu0
    %590 = vmatprep.mubr.f32.mxu0 0.0
    %v591 = vand.u32 %v74, 4294901760
    %592 = vmatmul.mubr.f32.gmra.mrb[0].mxu0 %v591
    %v593 = vpop.f32.mrb[0].mxu0
    %v594 = vadd.f32 %v493, %v593
    %v595 = vpop.f32.mrb[0].mxu0
    %596 = vdwg.mxu0
    %597 = vmatprep.subr.mxu0 0.0
    %v598 = vand.u32 %v59, 4294901760
    %599 = vmatpush1.msra.mxu0 %v598
    %600 = vmatprep.subr.mxu0 0.0
    %v601 = vand.u32 %v60, 4294901760
    %602 = vmatpush1.msra.mxu0 %v601
    %603 = vmatprep.subr.mxu0 0.0
    %v604 = vand.u32 %v61, 4294901760
    %605 = vmatpush1.msra.mxu0 %v604
    %606 = vmatprep.subr.mxu0 0.0
    %v607 = vand.u32 %v62, 4294901760
    %608 = vmatpush1.msra.mxu0 %v607
    %609 = vmatprep.subr.mxu0 0.0
    %610 = vmatpush1.msra.mxu0 0.0
    %611 = vmatprep.subr.mxu0 0.0
    %612 = vmatpush1.msra.mxu0 0.0
    %613 = vmatprep.subr.mxu0 0.0
    %614 = vmatpush1.msra.mxu0 0.0
    %615 = vmatprep.subr.mxu0 0.0
    %616 = vmatpush1.msra.mxu0 0.0
    %617 = vmatprep.subr.mxu0 0.0
    %618 = vmatpush1.msra.mxu0 0.0
    %619 = vmatprep.subr.mxu0 0.0
    %620 = vmatpush1.msra.mxu0 0.0
    %621 = vmatprep.subr.mxu0 0.0
    %622 = vmatpush1.msra.mxu0 0.0
    %623 = vmatprep.subr.mxu0 0.0
    %624 = vmatpush1.msra.mxu0 0.0
    %625 = vmatprep.subr.mxu0 0.0
    %626 = vmatpush1.msra.mxu0 0.0
    %627 = vmatprep.subr.mxu0 0.0
    %628 = vmatpush1.msra.mxu0 0.0
    %629 = vmatprep.subr.mxu0 0.0
    %630 = vmatpush1.msra.mxu0 0.0
    %631 = vmatprep.subr.mxu0 0.0
    %632 = vmatpush1.msra.mxu0 0.0
    %633 = vmatprep.subr.mxu0 0.0
    %634 = vmatpush1.msra.mxu0 0.0
    %635 = vmatprep.subr.mxu0 0.0
    %636 = vmatpush1.msra.mxu0 0.0
    %637 = vmatprep.subr.mxu0 0.0
    %638 = vmatpush1.msra.mxu0 0.0
    %639 = vmatprep.subr.mxu0 0.0
    %640 = vmatpush1.msra.mxu0 0.0
    %641 = vmatprep.subr.mxu0 0.0
    %642 = vmatpush1.msra.mxu0 0.0
    %643 = vmatprep.subr.mxu0 0.0
    %644 = vmatpush1.msra.mxu0 0.0
    %645 = vmatprep.subr.mxu0 0.0
    %646 = vmatpush1.msra.mxu0 0.0
    %647 = vmatprep.subr.mxu0 0.0
    %648 = vmatpush1.msra.mxu0 0.0
    %649 = vmatprep.subr.mxu0 0.0
    %650 = vmatpush1.msra.mxu0 0.0
    %651 = vmatprep.subr.mxu0 0.0
    %652 = vmatpush1.msra.mxu0 0.0
    %653 = vmatprep.subr.mxu0 0.0
    %654 = vmatpush1.msra.mxu0 0.0
    %655 = vmatprep.subr.mxu0 0.0
    %656 = vmatpush1.msra.mxu0 0.0
    %657 = vmatprep.subr.mxu0 0.0
    %658 = vmatpush1.msra.mxu0 0.0
    %659 = vmatprep.subr.mxu0 0.0
    %660 = vmatpush1.msra.mxu0 0.0
    %661 = vmatprep.subr.mxu0 0.0
    %662 = vmatpush1.msra.mxu0 0.0
    %663 = vmatprep.subr.mxu0 0.0
    %664 = vmatpush1.msra.mxu0 0.0
    %665 = vmatprep.mubr.f32.mxu0 0.0
    %v666 = vand.u32 %v65, 4294901760
    %667 = vmatmul.mubr.f32.gmra.mrb[0].mxu0 %v666
    %v668 = vpop.f32.mrb[0].mxu0
    %v669 = vadd.f32 %v576, %v668
    %v670 = vpop.f32.mrb[0].mxu0
    %671 = vmatprep.mubr.f32.mxu0 0.0
    %v672 = vand.u32 %v68, 4294901760
    %673 = vmatmul.mubr.f32.gmra.mrb[0].mxu0 %v672
    %v674 = vpop.f32.mrb[0].mxu0
    %v675 = vadd.f32 %v582, %v674
    %v676 = vpop.f32.mrb[0].mxu0
    %677 = vmatprep.mubr.f32.mxu0 0.0
    %v678 = vand.u32 %v71, 4294901760
    %679 = vmatmul.mubr.f32.gmra.mrb[0].mxu0 %v678
    %v680 = vpop.f32.mrb[0].mxu0
    %v681 = vadd.f32 %v588, %v680
    %v682 = vpop.f32.mrb[0].mxu0
    %683 = vmatprep.mubr.f32.mxu0 0.0
    %v684 = vand.u32 %v74, 4294901760
    %685 = vmatmul.mubr.f32.gmra.mrb[0].mxu0 %v684
    %v686 = vpop.f32.mrb[0].mxu0
    %v687 = vadd.f32 %v594, %v686
    %v688 = vpop.f32.mrb[0].mxu0
    %689 = vdwg.mxu0
    %vm690 = vcmask 523264
    %691 = vst.msk [vmem:[#allocation2] sm:$0xff] %vm690, %v669
    %692 = vst.msk [vmem:[#allocation2 + $0x8] sm:$0xff] %vm690, %v675
    %693 = vst.msk [vmem:[#allocation2 + $0x10] sm:$0xff] %vm690, %v681
    %694 = vst.msk [vmem:[#allocation2 + $0x18] sm:$0xff] %vm690, %v687
    %v695 = vld [vmem:[#allocation2] sm:$0xff]
    %v696 = vld [vmem:[#allocation2 + $0x8] sm:$0xff]
    %v697 = vld [vmem:[#allocation2 + $0x10] sm:$0xff]
    %v698 = vld [vmem:[#allocation2 + $0x18] sm:$0xff]
    %701 = vrot.lane.b32.xlu0 %v697, 16
    %v702 = vpop.permute.xlu0 %701
    %703 = vrot.lane.b32.xlu0 %v698, 16
    %v704 = vpop.permute.xlu0 %703
    %vm707 = vcmask 130048
    %v708 = vsel %vm707, %v695, %v702
    %v709 = vsel %vm707, %v696, %v704
    %710 = vst.msk [vmem:[#allocation3] sm:$0xff] %vm63, %v708
    %711 = vst.msk [vmem:[#allocation3 + $0x8] sm:$0xff] %vm63, %v709
    %v712 = vld [vmem:[#allocation2] sm:$0xff]
    %v713 = vld [vmem:[#allocation2 + $0x8] sm:$0xff]
    %v714 = vld [vmem:[#allocation2 + $0x10] sm:$0xff]
    %v715 = vld [vmem:[#allocation2 + $0x18] sm:$0xff]
    %718 = vrot.lane.b32.xlu0 %v712, 112
    %v719 = vpop.permute.xlu0 %718
    %720 = vrot.lane.b32.xlu0 %v713, 112
    %v721 = vpop.permute.xlu0 %720
    %v724 = vsel %vm707, %v719, %v714
    %v725 = vsel %vm707, %v721, %v715
    %726 = vst.msk [vmem:[#allocation3 + $0x10] sm:$0xff] %vm63, %v724
    %727 = vst.msk [vmem:[#allocation3 + $0x18] sm:$0xff] %vm63, %v725
    %v728 = vld [vmem:[#allocation2] sm:$0xff]
    %v729 = vld [vmem:[#allocation2 + $0x8] sm:$0xff]
    %v730 = vld [vmem:[#allocation2 + $0x10] sm:$0xff]
    %v731 = vld [vmem:[#allocation2 + $0x18] sm:$0xff]
    %734 = vrot.lane.b32.xlu0 %v728, 96
    %v735 = vpop.permute.xlu0 %734
    %736 = vrot.lane.b32.xlu0 %v729, 96
    %v737 = vpop.permute.xlu0 %736
    %742 = vrot.lane.b32.xlu0 %v730, 112
    %v743 = vpop.permute.xlu0 %742
    %744 = vrot.lane.b32.xlu0 %v731, 112
    %v745 = vpop.permute.xlu0 %744
    %v748 = vsel %vm707, %v735, %v743
    %v749 = vsel %vm707, %v737, %v745
    %750 = vst.msk [vmem:[#allocation3 + $0x20] sm:$0xff] %vm63, %v748
    %751 = vst.msk [vmem:[#allocation3 + $0x28] sm:$0xff] %vm63, %v749
    %v752 = vld [vmem:[#allocation2] sm:$0xff]
    %v753 = vld [vmem:[#allocation2 + $0x8] sm:$0xff]
    %v754 = vld [vmem:[#allocation2 + $0x10] sm:$0xff]
    %v755 = vld [vmem:[#allocation2 + $0x18] sm:$0xff]
    %758 = vrot.lane.b32.xlu0 %v752, 80
    %v759 = vpop.permute.xlu0 %758
    %760 = vrot.lane.b32.xlu0 %v753, 80
    %v761 = vpop.permute.xlu0 %760
    %766 = vrot.lane.b32.xlu0 %v754, 96
    %v767 = vpop.permute.xlu0 %766
    %768 = vrot.lane.b32.xlu0 %v755, 96
    %v769 = vpop.permute.xlu0 %768
    %v772 = vsel %vm707, %v759, %v767
    %v773 = vsel %vm707, %v761, %v769
    %774 = vst.msk [vmem:[#allocation3 + $0x30] sm:$0xff] %vm63, %v772
    %775 = vst.msk [vmem:[#allocation3 + $0x38] sm:$0xff] %vm63, %v773
    %v776 = vld [vmem:[#allocation3] sm:$0xff]
    %v777 = vld [vmem:[#allocation3 + $0x8] sm:$0xff]
    %v778 = vld [vmem:[#allocation3 + $0x10] sm:$0xff]
    %v779 = vld [vmem:[#allocation3 + $0x18] sm:$0xff]
    %v780 = vld [vmem:[#allocation3 + $0x20] sm:$0xff]
    %v781 = vld [vmem:[#allocation3 + $0x28] sm:$0xff]
    %v782 = vld [vmem:[#allocation3 + $0x30] sm:$0xff]
    %v783 = vld [vmem:[#allocation3 + $0x38] sm:$0xff]
    %v784 = vld [vmem:[#allocation8] sm:$0xff]
    %v785 = vld [vmem:[#allocation8 + $0x8] sm:$0xff]
    %v786 = vld [vmem:[#allocation8 + $0x10] sm:$0xff]
    %v787 = vld [vmem:[#allocation8 + $0x18] sm:$0xff]
    %v789 = vsel %vm63, %v776, 0
    %v792 = vsel %vm63, %v777, 0
    %v795 = vsel %vm63, %v778, 0
    %v798 = vsel %vm63, %v779, 0
    %v801 = vsel %vm63, %v780, 0
    %v804 = vsel %vm63, %v781, 0
    %v807 = vsel %vm63, %v782, 0
    %v810 = vsel %vm63, %v783, 0
    %812 = vmatprep.subr.mxu0 0.0
    %v813 = vand.u32 %v784, 4294901760
    %814 = vmatpush1.msra.mxu0 %v813
    %815 = vmatprep.subr.mxu0 0.0
    %v816 = vand.u32 %v785, 4294901760
    %817 = vmatpush1.msra.mxu0 %v816
    %818 = vmatprep.subr.mxu0 0.0
    %v819 = vand.u32 %v786, 4294901760
    %820 = vmatpush1.msra.mxu0 %v819
    %821 = vmatprep.subr.mxu0 0.0
    %v822 = vand.u32 %v787, 4294901760
    %823 = vmatpush1.msra.mxu0 %v822
    %824 = vmatprep.subr.mxu0 0.0
    %825 = vmatpush1.msra.mxu0 0.0
    %826 = vmatprep.subr.mxu0 0.0
    %827 = vmatpush1.msra.mxu0 0.0
    %828 = vmatprep.subr.mxu0 0.0
    %829 = vmatpush1.msra.mxu0 0.0
    %830 = vmatprep.subr.mxu0 0.0
    %831 = vmatpush1.msra.mxu0 0.0
    %832 = vmatprep.subr.mxu0 0.0
    %833 = vmatpush1.msra.mxu0 0.0
    %834 = vmatprep.subr.mxu0 0.0
    %835 = vmatpush1.msra.mxu0 0.0
    %836 = vmatprep.subr.mxu0 0.0
    %837 = vmatpush1.msra.mxu0 0.0
    %838 = vmatprep.subr.mxu0 0.0
    %839 = vmatpush1.msra.mxu0 0.0
    %840 = vmatprep.subr.mxu0 0.0
    %841 = vmatpush1.msra.mxu0 0.0
    %842 = vmatprep.subr.mxu0 0.0
    %843 = vmatpush1.msra.mxu0 0.0
    %844 = vmatprep.subr.mxu0 0.0
    %845 = vmatpush1.msra.mxu0 0.0
    %846 = vmatprep.subr.mxu0 0.0
    %847 = vmatpush1.msra.mxu0 0.0
    %848 = vmatprep.subr.mxu0 0.0
    %849 = vmatpush1.msra.mxu0 0.0
    %850 = vmatprep.subr.mxu0 0.0
    %851 = vmatpush1.msra.mxu0 0.0
    %852 = vmatprep.subr.mxu0 0.0
    %853 = vmatpush1.msra.mxu0 0.0
    %854 = vmatprep.subr.mxu0 0.0
    %855 = vmatpush1.msra.mxu0 0.0
    %856 = vmatprep.subr.mxu0 0.0
    %857 = vmatpush1.msra.mxu0 0.0
    %858 = vmatprep.subr.mxu0 0.0
    %859 = vmatpush1.msra.mxu0 0.0
    %860 = vmatprep.subr.mxu0 0.0
    %861 = vmatpush1.msra.mxu0 0.0
    %862 = vmatprep.subr.mxu0 0.0
    %863 = vmatpush1.msra.mxu0 0.0
    %864 = vmatprep.subr.mxu0 0.0
    %865 = vmatpush1.msra.mxu0 0.0
    %866 = vmatprep.subr.mxu0 0.0
    %867 = vmatpush1.msra.mxu0 0.0
    %868 = vmatprep.subr.mxu0 0.0
    %869 = vmatpush1.msra.mxu0 0.0
    %870 = vmatprep.subr.mxu0 0.0
    %871 = vmatpush1.msra.mxu0 0.0
    %872 = vmatprep.subr.mxu0 0.0
    %873 = vmatpush1.msra.mxu0 0.0
    %874 = vmatprep.subr.mxu0 0.0
    %875 = vmatpush1.msra.mxu0 0.0
    %876 = vmatprep.subr.mxu0 0.0
    %877 = vmatpush1.msra.mxu0 0.0
    %878 = vmatprep.subr.mxu0 0.0
    %879 = vmatpush1.msra.mxu0 0.0
    %880 = vmatprep.mubr.f32.mxu0 0.0
    %v881 = vand.u32 %v789, 4294901760
    %v882 = vsub.f32 %v789, %v881
    %v883 = vand.u32 %v882, 4294901760
    %v884 = vsub.f32 %v882, %v883
    %v885 = vand.u32 %v884, 4294901760
    %886 = vmatmul.mubr.f32.gmra.mrb[0].mxu0 %v885
    %v887 = vpop.f32.mrb[0].mxu0
    %v888 = vadd.f32 0.0, %v887
    %v889 = vpop.f32.mrb[0].mxu0
    %890 = vmatprep.mubr.f32.mxu0 0.0
    %v891 = vand.u32 %v792, 4294901760
    %v892 = vsub.f32 %v792, %v891
    %v893 = vand.u32 %v892, 4294901760
    %v894 = vsub.f32 %v892, %v893
    %v895 = vand.u32 %v894, 4294901760
    %896 = vmatmul.mubr.f32.gmra.mrb[0].mxu0 %v895
    %v897 = vpop.f32.mrb[0].mxu0
    %v898 = vadd.f32 0.0, %v897
    %v899 = vpop.f32.mrb[0].mxu0
    %900 = vmatprep.mubr.f32.mxu0 0.0
    %v901 = vand.u32 %v795, 4294901760
    %v902 = vsub.f32 %v795, %v901
    %v903 = vand.u32 %v902, 4294901760
    %v904 = vsub.f32 %v902, %v903
    %v905 = vand.u32 %v904, 4294901760
    %906 = vmatmul.mubr.f32.gmra.mrb[0].mxu0 %v905
    %v907 = vpop.f32.mrb[0].mxu0
    %v908 = vadd.f32 0.0, %v907
    %v909 = vpop.f32.mrb[0].mxu0
    %910 = vmatprep.mubr.f32.mxu0 0.0
    %v911 = vand.u32 %v798, 4294901760
    %v912 = vsub.f32 %v798, %v911
    %v913 = vand.u32 %v912, 4294901760
    %v914 = vsub.f32 %v912, %v913
    %v915 = vand.u32 %v914, 4294901760
    %916 = vmatmul.mubr.f32.gmra.mrb[0].mxu0 %v915
    %v917 = vpop.f32.mrb[0].mxu0
    %v918 = vadd.f32 0.0, %v917
    %v919 = vpop.f32.mrb[0].mxu0
    %920 = vmatprep.mubr.f32.mxu0 0.0
    %v921 = vand.u32 %v801, 4294901760
    %v922 = vsub.f32 %v801, %v921
    %v923 = vand.u32 %v922, 4294901760
    %v924 = vsub.f32 %v922, %v923
    %v925 = vand.u32 %v924, 4294901760
    %926 = vmatmul.mubr.f32.gmra.mrb[0].mxu0 %v925
    %v927 = vpop.f32.mrb[0].mxu0
    %v928 = vadd.f32 0.0, %v927
    %v929 = vpop.f32.mrb[0].mxu0
    %930 = vmatprep.mubr.f32.mxu0 0.0
    %v931 = vand.u32 %v804, 4294901760
    %v932 = vsub.f32 %v804, %v931
    %v933 = vand.u32 %v932, 4294901760
    %v934 = vsub.f32 %v932, %v933
    %v935 = vand.u32 %v934, 4294901760
    %936 = vmatmul.mubr.f32.gmra.mrb[0].mxu0 %v935
    %v937 = vpop.f32.mrb[0].mxu0
    %v938 = vadd.f32 0.0, %v937
    %v939 = vpop.f32.mrb[0].mxu0
    %940 = vmatprep.mubr.f32.mxu0 0.0
    %v941 = vand.u32 %v807, 4294901760
    %v942 = vsub.f32 %v807, %v941
    %v943 = vand.u32 %v942, 4294901760
    %v944 = vsub.f32 %v942, %v943
    %v945 = vand.u32 %v944, 4294901760
    %946 = vmatmul.mubr.f32.gmra.mrb[0].mxu0 %v945
    %v947 = vpop.f32.mrb[0].mxu0
    %v948 = vadd.f32 0.0, %v947
    %v949 = vpop.f32.mrb[0].mxu0
    %950 = vmatprep.mubr.f32.mxu0 0.0
    %v951 = vand.u32 %v810, 4294901760
    %v952 = vsub.f32 %v810, %v951
    %v953 = vand.u32 %v952, 4294901760
    %v954 = vsub.f32 %v952, %v953
    %v955 = vand.u32 %v954, 4294901760
    %956 = vmatmul.mubr.f32.gmra.mrb[0].mxu0 %v955
    %v957 = vpop.f32.mrb[0].mxu0
    %v958 = vadd.f32 0.0, %v957
    %v959 = vpop.f32.mrb[0].mxu0
    %960 = vdwg.mxu0
    %961 = vmatprep.subr.mxu0 0.0
    %v962 = vand.u32 %v784, 4294901760
    %v963 = vsub.f32 %v784, %v962
    %v964 = vand.u32 %v963, 4294901760
    %v965 = vsub.f32 %v963, %v964
    %v966 = vand.u32 %v965, 4294901760
    %967 = vmatpush1.msra.mxu0 %v966
    %968 = vmatprep.subr.mxu0 0.0
    %v969 = vand.u32 %v785, 4294901760
    %v970 = vsub.f32 %v785, %v969
    %v971 = vand.u32 %v970, 4294901760
    %v972 = vsub.f32 %v970, %v971
    %v973 = vand.u32 %v972, 4294901760
    %974 = vmatpush1.msra.mxu0 %v973
    %975 = vmatprep.subr.mxu0 0.0
    %v976 = vand.u32 %v786, 4294901760
    %v977 = vsub.f32 %v786, %v976
    %v978 = vand.u32 %v977, 4294901760
    %v979 = vsub.f32 %v977, %v978
    %v980 = vand.u32 %v979, 4294901760
    %981 = vmatpush1.msra.mxu0 %v980
    %982 = vmatprep.subr.mxu0 0.0
    %v983 = vand.u32 %v787, 4294901760
    %v984 = vsub.f32 %v787, %v983
    %v985 = vand.u32 %v984, 4294901760
    %v986 = vsub.f32 %v984, %v985
    %v987 = vand.u32 %v986, 4294901760
    %988 = vmatpush1.msra.mxu0 %v987
    %989 = vmatprep.subr.mxu0 0.0
    %990 = vmatpush1.msra.mxu0 0.0
    %991 = vmatprep.subr.mxu0 0.0
    %992 = vmatpush1.msra.mxu0 0.0
    %993 = vmatprep.subr.mxu0 0.0
    %994 = vmatpush1.msra.mxu0 0.0
    %995 = vmatprep.subr.mxu0 0.0
    %996 = vmatpush1.msra.mxu0 0.0
    %997 = vmatprep.subr.mxu0 0.0
    %998 = vmatpush1.msra.mxu0 0.0
    %999 = vmatprep.subr.mxu0 0.0
    %1000 = vmatpush1.msra.mxu0 0.0
    %1001 = vmatprep.subr.mxu0 0.0
    %1002 = vmatpush1.msra.mxu0 0.0
    %1003 = vmatprep.subr.mxu0 0.0
    %1004 = vmatpush1.msra.mxu0 0.0
    %1005 = vmatprep.subr.mxu0 0.0
    %1006 = vmatpush1.msra.mxu0 0.0
    %1007 = vmatprep.subr.mxu0 0.0
    %1008 = vmatpush1.msra.mxu0 0.0
    %1009 = vmatprep.subr.mxu0 0.0
    %1010 = vmatpush1.msra.mxu0 0.0
    %1011 = vmatprep.subr.mxu0 0.0
    %1012 = vmatpush1.msra.mxu0 0.0
    %1013 = vmatprep.subr.mxu0 0.0
    %1014 = vmatpush1.msra.mxu0 0.0
    %1015 = vmatprep.subr.mxu0 0.0
    %1016 = vmatpush1.msra.mxu0 0.0
    %1017 = vmatprep.subr.mxu0 0.0
    %1018 = vmatpush1.msra.mxu0 0.0
    %1019 = vmatprep.subr.mxu0 0.0
    %1020 = vmatpush1.msra.mxu0 0.0
    %1021 = vmatprep.subr.mxu0 0.0
    %1022 = vmatpush1.msra.mxu0 0.0
    %1023 = vmatprep.subr.mxu0 0.0
    %1024 = vmatpush1.msra.mxu0 0.0
    %1025 = vmatprep.subr.mxu0 0.0
    %1026 = vmatpush1.msra.mxu0 0.0
    %1027 = vmatprep.subr.mxu0 0.0
    %1028 = vmatpush1.msra.mxu0 0.0
    %1029 = vmatprep.subr.mxu0 0.0
    %1030 = vmatpush1.msra.mxu0 0.0
    %1031 = vmatprep.subr.mxu0 0.0
    %1032 = vmatpush1.msra.mxu0 0.0
    %1033 = vmatprep.subr.mxu0 0.0
    %1034 = vmatpush1.msra.mxu0 0.0
    %1035 = vmatprep.subr.mxu0 0.0
    %1036 = vmatpush1.msra.mxu0 0.0
    %1037 = vmatprep.subr.mxu0 0.0
    %1038 = vmatpush1.msra.mxu0 0.0
    %1039 = vmatprep.subr.mxu0 0.0
    %1040 = vmatpush1.msra.mxu0 0.0
    %1041 = vmatprep.subr.mxu0 0.0
    %1042 = vmatpush1.msra.mxu0 0.0
    %1043 = vmatprep.subr.mxu0 0.0
    %1044 = vmatpush1.msra.mxu0 0.0
    %1045 = vmatprep.mubr.f32.mxu0 0.0
    %v1046 = vand.u32 %v789, 4294901760
    %1047 = vmatmul.mubr.f32.gmra.mrb[0].mxu0 %v1046
    %v1048 = vpop.f32.mrb[0].mxu0
    %v1049 = vadd.f32 %v888, %v1048
    %v1050 = vpop.f32.mrb[0].mxu0
    %1051 = vmatprep.mubr.f32.mxu0 0.0
    %v1052 = vand.u32 %v792, 4294901760
    %1053 = vmatmul.mubr.f32.gmra.mrb[0].mxu0 %v1052
    %v1054 = vpop.f32.mrb[0].mxu0
    %v1055 = vadd.f32 %v898, %v1054
    %v1056 = vpop.f32.mrb[0].mxu0
    %1057 = vmatprep.mubr.f32.mxu0 0.0
    %v1058 = vand.u32 %v795, 4294901760
    %1059 = vmatmul.mubr.f32.gmra.mrb[0].mxu0 %v1058
    %v1060 = vpop.f32.mrb[0].mxu0
    %v1061 = vadd.f32 %v908, %v1060
    %v1062 = vpop.f32.mrb[0].mxu0
    %1063 = vmatprep.mubr.f32.mxu0 0.0
    %v1064 = vand.u32 %v798, 4294901760
    %1065 = vmatmul.mubr.f32.gmra.mrb[0].mxu0 %v1064
    %v1066 = vpop.f32.mrb[0].mxu0
    %v1067 = vadd.f32 %v918, %v1066
    %v1068 = vpop.f32.mrb[0].mxu0
    %1069 = vmatprep.mubr.f32.mxu0 0.0
    %v1070 = vand.u32 %v801, 4294901760
    %1071 = vmatmul.mubr.f32.gmra.mrb[0].mxu0 %v1070
    %v1072 = vpop.f32.mrb[0].mxu0
    %v1073 = vadd.f32 %v928, %v1072
    %v1074 = vpop.f32.mrb[0].mxu0
    %1075 = vmatprep.mubr.f32.mxu0 0.0
    %v1076 = vand.u32 %v804, 4294901760
    %1077 = vmatmul.mubr.f32.gmra.mrb[0].mxu0 %v1076
    %v1078 = vpop.f32.mrb[0].mxu0
    %v1079 = vadd.f32 %v938, %v1078
    %v1080 = vpop.f32.mrb[0].mxu0
    %1081 = vmatprep.mubr.f32.mxu0 0.0
    %v1082 = vand.u32 %v807, 4294901760
    %1083 = vmatmul.mubr.f32.gmra.mrb[0].mxu0 %v1082
    %v1084 = vpop.f32.mrb[0].mxu0
    %v1085 = vadd.f32 %v948, %v1084
    %v1086 = vpop.f32.mrb[0].mxu0
    %1087 = vmatprep.mubr.f32.mxu0 0.0
    %v1088 = vand.u32 %v810, 4294901760
    %1089 = vmatmul.mubr.f32.gmra.mrb[0].mxu0 %v1088
    %v1090 = vpop.f32.mrb[0].mxu0
    %v1091 = vadd.f32 %v958, %v1090
    %v1092 = vpop.f32.mrb[0].mxu0
    %1093 = vdwg.mxu0
    %1094 = vmatprep.subr.mxu0 0.0
    %v1095 = vand.u32 %v784, 4294901760
    %v1096 = vsub.f32 %v784, %v1095
    %1097 = vmatpush1.msra.mxu0 %v1096
    %1098 = vmatprep.subr.mxu0 0.0
    %v1099 = vand.u32 %v785, 4294901760
    %v1100 = vsub.f32 %v785, %v1099
    %1101 = vmatpush1.msra.mxu0 %v1100
    %1102 = vmatprep.subr.mxu0 0.0
    %v1103 = vand.u32 %v786, 4294901760
    %v1104 = vsub.f32 %v786, %v1103
    %1105 = vmatpush1.msra.mxu0 %v1104
    %1106 = vmatprep.subr.mxu0 0.0
    %v1107 = vand.u32 %v787, 4294901760
    %v1108 = vsub.f32 %v787, %v1107
    %1109 = vmatpush1.msra.mxu0 %v1108
    %1110 = vmatprep.subr.mxu0 0.0
    %1111 = vmatpush1.msra.mxu0 0.0
    %1112 = vmatprep.subr.mxu0 0.0
    %1113 = vmatpush1.msra.mxu0 0.0
    %1114 = vmatprep.subr.mxu0 0.0
    %1115 = vmatpush1.msra.mxu0 0.0
    %1116 = vmatprep.subr.mxu0 0.0
    %1117 = vmatpush1.msra.mxu0 0.0
    %1118 = vmatprep.subr.mxu0 0.0
    %1119 = vmatpush1.msra.mxu0 0.0
    %1120 = vmatprep.subr.mxu0 0.0
    %1121 = vmatpush1.msra.mxu0 0.0
    %1122 = vmatprep.subr.mxu0 0.0
    %1123 = vmatpush1.msra.mxu0 0.0
    %1124 = vmatprep.subr.mxu0 0.0
    %1125 = vmatpush1.msra.mxu0 0.0
    %1126 = vmatprep.subr.mxu0 0.0
    %1127 = vmatpush1.msra.mxu0 0.0
    %1128 = vmatprep.subr.mxu0 0.0
    %1129 = vmatpush1.msra.mxu0 0.0
    %1130 = vmatprep.subr.mxu0 0.0
    %1131 = vmatpush1.msra.mxu0 0.0
    %1132 = vmatprep.subr.mxu0 0.0
    %1133 = vmatpush1.msra.mxu0 0.0
    %1134 = vmatprep.subr.mxu0 0.0
    %1135 = vmatpush1.msra.mxu0 0.0
    %1136 = vmatprep.subr.mxu0 0.0
    %1137 = vmatpush1.msra.mxu0 0.0
    %1138 = vmatprep.subr.mxu0 0.0
    %1139 = vmatpush1.msra.mxu0 0.0
    %1140 = vmatprep.subr.mxu0 0.0
    %1141 = vmatpush1.msra.mxu0 0.0
    %1142 = vmatprep.subr.mxu0 0.0
    %1143 = vmatpush1.msra.mxu0 0.0
    %1144 = vmatprep.subr.mxu0 0.0
    %1145 = vmatpush1.msra.mxu0 0.0
    %1146 = vmatprep.subr.mxu0 0.0
    %1147 = vmatpush1.msra.mxu0 0.0
    %1148 = vmatprep.subr.mxu0 0.0
    %1149 = vmatpush1.msra.mxu0 0.0
    %1150 = vmatprep.subr.mxu0 0.0
    %1151 = vmatpush1.msra.mxu0 0.0
    %1152 = vmatprep.subr.mxu0 0.0
    %1153 = vmatpush1.msra.mxu0 0.0
    %1154 = vmatprep.subr.mxu0 0.0
    %1155 = vmatpush1.msra.mxu0 0.0
    %1156 = vmatprep.subr.mxu0 0.0
    %1157 = vmatpush1.msra.mxu0 0.0
    %1158 = vmatprep.subr.mxu0 0.0
    %1159 = vmatpush1.msra.mxu0 0.0
    %1160 = vmatprep.subr.mxu0 0.0
    %1161 = vmatpush1.msra.mxu0 0.0
    %1162 = vmatprep.subr.mxu0 0.0
    %1163 = vmatpush1.msra.mxu0 0.0
    %1164 = vmatprep.subr.mxu0 0.0
    %1165 = vmatpush1.msra.mxu0 0.0
    %1166 = vmatprep.mubr.f32.mxu0 0.0
    %v1167 = vand.u32 %v789, 4294901760
    %v1168 = vsub.f32 %v789, %v1167
    %1169 = vmatmul.mubr.f32.gmra.mrb[0].mxu0 %v1168
    %v1170 = vpop.f32.mrb[0].mxu0
    %v1171 = vadd.f32 %v1049, %v1170
    %v1172 = vpop.f32.mrb[0].mxu0
    %1173 = vmatprep.mubr.f32.mxu0 0.0
    %v1174 = vand.u32 %v792, 4294901760
    %v1175 = vsub.f32 %v792, %v1174
    %1176 = vmatmul.mubr.f32.gmra.mrb[0].mxu0 %v1175
    %v1177 = vpop.f32.mrb[0].mxu0
    %v1178 = vadd.f32 %v1055, %v1177
    %v1179 = vpop.f32.mrb[0].mxu0
    %1180 = vmatprep.mubr.f32.mxu0 0.0
    %v1181 = vand.u32 %v795, 4294901760
    %v1182 = vsub.f32 %v795, %v1181
    %1183 = vmatmul.mubr.f32.gmra.mrb[0].mxu0 %v1182
    %v1184 = vpop.f32.mrb[0].mxu0
    %v1185 = vadd.f32 %v1061, %v1184
    %v1186 = vpop.f32.mrb[0].mxu0
    %1187 = vmatprep.mubr.f32.mxu0 0.0
    %v1188 = vand.u32 %v798, 4294901760
    %v1189 = vsub.f32 %v798, %v1188
    %1190 = vmatmul.mubr.f32.gmra.mrb[0].mxu0 %v1189
    %v1191 = vpop.f32.mrb[0].mxu0
    %v1192 = vadd.f32 %v1067, %v1191
    %v1193 = vpop.f32.mrb[0].mxu0
    %1194 = vmatprep.mubr.f32.mxu0 0.0
    %v1195 = vand.u32 %v801, 4294901760
    %v1196 = vsub.f32 %v801, %v1195
    %1197 = vmatmul.mubr.f32.gmra.mrb[0].mxu0 %v1196
    %v1198 = vpop.f32.mrb[0].mxu0
    %v1199 = vadd.f32 %v1073, %v1198
    %v1200 = vpop.f32.mrb[0].mxu0
    %1201 = vmatprep.mubr.f32.mxu0 0.0
    %v1202 = vand.u32 %v804, 4294901760
    %v1203 = vsub.f32 %v804, %v1202
    %1204 = vmatmul.mubr.f32.gmra.mrb[0].mxu0 %v1203
    %v1205 = vpop.f32.mrb[0].mxu0
    %v1206 = vadd.f32 %v1079, %v1205
    %v1207 = vpop.f32.mrb[0].mxu0
    %1208 = vmatprep.mubr.f32.mxu0 0.0
    %v1209 = vand.u32 %v807, 4294901760
    %v1210 = vsub.f32 %v807, %v1209
    %1211 = vmatmul.mubr.f32.gmra.mrb[0].mxu0 %v1210
    %v1212 = vpop.f32.mrb[0].mxu0
    %v1213 = vadd.f32 %v1085, %v1212
    %v1214 = vpop.f32.mrb[0].mxu0
    %1215 = vmatprep.mubr.f32.mxu0 0.0
    %v1216 = vand.u32 %v810, 4294901760
    %v1217 = vsub.f32 %v810, %v1216
    %1218 = vmatmul.mubr.f32.gmra.mrb[0].mxu0 %v1217
    %v1219 = vpop.f32.mrb[0].mxu0
    %v1220 = vadd.f32 %v1091, %v1219
    %v1221 = vpop.f32.mrb[0].mxu0
    %1222 = vdwg.mxu0
    %1223 = vmatprep.subr.mxu0 0.0
    %v1224 = vand.u32 %v784, 4294901760
    %1225 = vmatpush1.msra.mxu0 %v1224
    %1226 = vmatprep.subr.mxu0 0.0
    %v1227 = vand.u32 %v785, 4294901760
    %1228 = vmatpush1.msra.mxu0 %v1227
    %1229 = vmatprep.subr.mxu0 0.0
    %v1230 = vand.u32 %v786, 4294901760
    %1231 = vmatpush1.msra.mxu0 %v1230
    %1232 = vmatprep.subr.mxu0 0.0
    %v1233 = vand.u32 %v787, 4294901760
    %1234 = vmatpush1.msra.mxu0 %v1233
    %1235 = vmatprep.subr.mxu0 0.0
    %1236 = vmatpush1.msra.mxu0 0.0
    %1237 = vmatprep.subr.mxu0 0.0
    %1238 = vmatpush1.msra.mxu0 0.0
    %1239 = vmatprep.subr.mxu0 0.0
    %1240 = vmatpush1.msra.mxu0 0.0
    %1241 = vmatprep.subr.mxu0 0.0
    %1242 = vmatpush1.msra.mxu0 0.0
    %1243 = vmatprep.subr.mxu0 0.0
    %1244 = vmatpush1.msra.mxu0 0.0
    %1245 = vmatprep.subr.mxu0 0.0
    %1246 = vmatpush1.msra.mxu0 0.0
    %1247 = vmatprep.subr.mxu0 0.0
    %1248 = vmatpush1.msra.mxu0 0.0
    %1249 = vmatprep.subr.mxu0 0.0
    %1250 = vmatpush1.msra.mxu0 0.0
    %1251 = vmatprep.subr.mxu0 0.0
    %1252 = vmatpush1.msra.mxu0 0.0
    %1253 = vmatprep.subr.mxu0 0.0
    %1254 = vmatpush1.msra.mxu0 0.0
    %1255 = vmatprep.subr.mxu0 0.0
    %1256 = vmatpush1.msra.mxu0 0.0
    %1257 = vmatprep.subr.mxu0 0.0
    %1258 = vmatpush1.msra.mxu0 0.0
    %1259 = vmatprep.subr.mxu0 0.0
    %1260 = vmatpush1.msra.mxu0 0.0
    %1261 = vmatprep.subr.mxu0 0.0
    %1262 = vmatpush1.msra.mxu0 0.0
    %1263 = vmatprep.subr.mxu0 0.0
    %1264 = vmatpush1.msra.mxu0 0.0
    %1265 = vmatprep.subr.mxu0 0.0
    %1266 = vmatpush1.msra.mxu0 0.0
    %1267 = vmatprep.subr.mxu0 0.0
    %1268 = vmatpush1.msra.mxu0 0.0
    %1269 = vmatprep.subr.mxu0 0.0
    %1270 = vmatpush1.msra.mxu0 0.0
    %1271 = vmatprep.subr.mxu0 0.0
    %1272 = vmatpush1.msra.mxu0 0.0
    %1273 = vmatprep.subr.mxu0 0.0
    %1274 = vmatpush1.msra.mxu0 0.0
    %1275 = vmatprep.subr.mxu0 0.0
    %1276 = vmatpush1.msra.mxu0 0.0
    %1277 = vmatprep.subr.mxu0 0.0
    %1278 = vmatpush1.msra.mxu0 0.0
    %1279 = vmatprep.subr.mxu0 0.0
    %1280 = vmatpush1.msra.mxu0 0.0
    %1281 = vmatprep.subr.mxu0 0.0
    %1282 = vmatpush1.msra.mxu0 0.0
    %1283 = vmatprep.subr.mxu0 0.0
    %1284 = vmatpush1.msra.mxu0 0.0
    %1285 = vmatprep.subr.mxu0 0.0
    %1286 = vmatpush1.msra.mxu0 0.0
    %1287 = vmatprep.subr.mxu0 0.0
    %1288 = vmatpush1.msra.mxu0 0.0
    %1289 = vmatprep.subr.mxu0 0.0
    %1290 = vmatpush1.msra.mxu0 0.0
    %1291 = vmatprep.mubr.f32.mxu0 0.0
    %v1292 = vand.u32 %v789, 4294901760
    %v1293 = vsub.f32 %v789, %v1292
    %v1294 = vand.u32 %v1293, 4294901760
    %1295 = vmatmul.mubr.f32.gmra.mrb[0].mxu0 %v1294
    %v1296 = vpop.f32.mrb[0].mxu0
    %v1297 = vadd.f32 %v1171, %v1296
    %v1298 = vpop.f32.mrb[0].mxu0
    %1299 = vmatprep.mubr.f32.mxu0 0.0
    %v1300 = vand.u32 %v792, 4294901760
    %v1301 = vsub.f32 %v792, %v1300
    %v1302 = vand.u32 %v1301, 4294901760
    %1303 = vmatmul.mubr.f32.gmra.mrb[0].mxu0 %v1302
    %v1304 = vpop.f32.mrb[0].mxu0
    %v1305 = vadd.f32 %v1178, %v1304
    %v1306 = vpop.f32.mrb[0].mxu0
    %1307 = vmatprep.mubr.f32.mxu0 0.0
    %v1308 = vand.u32 %v795, 4294901760
    %v1309 = vsub.f32 %v795, %v1308
    %v1310 = vand.u32 %v1309, 4294901760
    %1311 = vmatmul.mubr.f32.gmra.mrb[0].mxu0 %v1310
    %v1312 = vpop.f32.mrb[0].mxu0
    %v1313 = vadd.f32 %v1185, %v1312
    %v1314 = vpop.f32.mrb[0].mxu0
    %1315 = vmatprep.mubr.f32.mxu0 0.0
    %v1316 = vand.u32 %v798, 4294901760
    %v1317 = vsub.f32 %v798, %v1316
    %v1318 = vand.u32 %v1317, 4294901760
    %1319 = vmatmul.mubr.f32.gmra.mrb[0].mxu0 %v1318
    %v1320 = vpop.f32.mrb[0].mxu0
    %v1321 = vadd.f32 %v1192, %v1320
    %v1322 = vpop.f32.mrb[0].mxu0
    %1323 = vmatprep.mubr.f32.mxu0 0.0
    %v1324 = vand.u32 %v801, 4294901760
    %v1325 = vsub.f32 %v801, %v1324
    %v1326 = vand.u32 %v1325, 4294901760
    %1327 = vmatmul.mubr.f32.gmra.mrb[0].mxu0 %v1326
    %v1328 = vpop.f32.mrb[0].mxu0
    %v1329 = vadd.f32 %v1199, %v1328
    %v1330 = vpop.f32.mrb[0].mxu0
    %1331 = vmatprep.mubr.f32.mxu0 0.0
    %v1332 = vand.u32 %v804, 4294901760
    %v1333 = vsub.f32 %v804, %v1332
    %v1334 = vand.u32 %v1333, 4294901760
    %1335 = vmatmul.mubr.f32.gmra.mrb[0].mxu0 %v1334
    %v1336 = vpop.f32.mrb[0].mxu0
    %v1337 = vadd.f32 %v1206, %v1336
    %v1338 = vpop.f32.mrb[0].mxu0
    %1339 = vmatprep.mubr.f32.mxu0 0.0
    %v1340 = vand.u32 %v807, 4294901760
    %v1341 = vsub.f32 %v807, %v1340
    %v1342 = vand.u32 %v1341, 4294901760
    %1343 = vmatmul.mubr.f32.gmra.mrb[0].mxu0 %v1342
    %v1344 = vpop.f32.mrb[0].mxu0
    %v1345 = vadd.f32 %v1213, %v1344
    %v1346 = vpop.f32.mrb[0].mxu0
    %1347 = vmatprep.mubr.f32.mxu0 0.0
    %v1348 = vand.u32 %v810, 4294901760
    %v1349 = vsub.f32 %v810, %v1348
    %v1350 = vand.u32 %v1349, 4294901760
    %1351 = vmatmul.mubr.f32.gmra.mrb[0].mxu0 %v1350
    %v1352 = vpop.f32.mrb[0].mxu0
    %v1353 = vadd.f32 %v1220, %v1352
    %v1354 = vpop.f32.mrb[0].mxu0
    %1355 = vdwg.mxu0
    %1356 = vmatprep.subr.mxu0 0.0
    %v1357 = vand.u32 %v784, 4294901760
    %v1358 = vsub.f32 %v784, %v1357
    %v1359 = vand.u32 %v1358, 4294901760
    %1360 = vmatpush1.msra.mxu0 %v1359
    %1361 = vmatprep.subr.mxu0 0.0
    %v1362 = vand.u32 %v785, 4294901760
    %v1363 = vsub.f32 %v785, %v1362
    %v1364 = vand.u32 %v1363, 4294901760
    %1365 = vmatpush1.msra.mxu0 %v1364
    %1366 = vmatprep.subr.mxu0 0.0
    %v1367 = vand.u32 %v786, 4294901760
    %v1368 = vsub.f32 %v786, %v1367
    %v1369 = vand.u32 %v1368, 4294901760
    %1370 = vmatpush1.msra.mxu0 %v1369
    %1371 = vmatprep.subr.mxu0 0.0
    %v1372 = vand.u32 %v787, 4294901760
    %v1373 = vsub.f32 %v787, %v1372
    %v1374 = vand.u32 %v1373, 4294901760
    %1375 = vmatpush1.msra.mxu0 %v1374
    %1376 = vmatprep.subr.mxu0 0.0
    %1377 = vmatpush1.msra.mxu0 0.0
    %1378 = vmatprep.subr.mxu0 0.0
    %1379 = vmatpush1.msra.mxu0 0.0
    %1380 = vmatprep.subr.mxu0 0.0
    %1381 = vmatpush1.msra.mxu0 0.0
    %1382 = vmatprep.subr.mxu0 0.0
    %1383 = vmatpush1.msra.mxu0 0.0
    %1384 = vmatprep.subr.mxu0 0.0
    %1385 = vmatpush1.msra.mxu0 0.0
    %1386 = vmatprep.subr.mxu0 0.0
    %1387 = vmatpush1.msra.mxu0 0.0
    %1388 = vmatprep.subr.mxu0 0.0
    %1389 = vmatpush1.msra.mxu0 0.0
    %1390 = vmatprep.subr.mxu0 0.0
    %1391 = vmatpush1.msra.mxu0 0.0
    %1392 = vmatprep.subr.mxu0 0.0
    %1393 = vmatpush1.msra.mxu0 0.0
    %1394 = vmatprep.subr.mxu0 0.0
    %1395 = vmatpush1.msra.mxu0 0.0
    %1396 = vmatprep.subr.mxu0 0.0
    %1397 = vmatpush1.msra.mxu0 0.0
    %1398 = vmatprep.subr.mxu0 0.0
    %1399 = vmatpush1.msra.mxu0 0.0
    %1400 = vmatprep.subr.mxu0 0.0
    %1401 = vmatpush1.msra.mxu0 0.0
    %1402 = vmatprep.subr.mxu0 0.0
    %1403 = vmatpush1.msra.mxu0 0.0
    %1404 = vmatprep.subr.mxu0 0.0
    %1405 = vmatpush1.msra.mxu0 0.0
    %1406 = vmatprep.subr.mxu0 0.0
    %1407 = vmatpush1.msra.mxu0 0.0
    %1408 = vmatprep.subr.mxu0 0.0
    %1409 = vmatpush1.msra.mxu0 0.0
    %1410 = vmatprep.subr.mxu0 0.0
    %1411 = vmatpush1.msra.mxu0 0.0
    %1412 = vmatprep.subr.mxu0 0.0
    %1413 = vmatpush1.msra.mxu0 0.0
    %1414 = vmatprep.subr.mxu0 0.0
    %1415 = vmatpush1.msra.mxu0 0.0
    %1416 = vmatprep.subr.mxu0 0.0
    %1417 = vmatpush1.msra.mxu0 0.0
    %1418 = vmatprep.subr.mxu0 0.0
    %1419 = vmatpush1.msra.mxu0 0.0
    %1420 = vmatprep.subr.mxu0 0.0
    %1421 = vmatpush1.msra.mxu0 0.0
    %1422 = vmatprep.subr.mxu0 0.0
    %1423 = vmatpush1.msra.mxu0 0.0
    %1424 = vmatprep.subr.mxu0 0.0
    %1425 = vmatpush1.msra.mxu0 0.0
    %1426 = vmatprep.subr.mxu0 0.0
    %1427 = vmatpush1.msra.mxu0 0.0
    %1428 = vmatprep.subr.mxu0 0.0
    %1429 = vmatpush1.msra.mxu0 0.0
    %1430 = vmatprep.subr.mxu0 0.0
    %1431 = vmatpush1.msra.mxu0 0.0
    %1432 = vmatprep.mubr.f32.mxu0 0.0
    %v1433 = vand.u32 %v789, 4294901760
    %1434 = vmatmul.mubr.f32.gmra.mrb[0].mxu0 %v1433
    %v1435 = vpop.f32.mrb[0].mxu0
    %v1436 = vadd.f32 %v1297, %v1435
    %v1437 = vpop.f32.mrb[0].mxu0
    %1438 = vmatprep.mubr.f32.mxu0 0.0
    %v1439 = vand.u32 %v792, 4294901760
    %1440 = vmatmul.mubr.f32.gmra.mrb[0].mxu0 %v1439
    %v1441 = vpop.f32.mrb[0].mxu0
    %v1442 = vadd.f32 %v1305, %v1441
    %v1443 = vpop.f32.mrb[0].mxu0
    %1444 = vmatprep.mubr.f32.mxu0 0.0
    %v1445 = vand.u32 %v795, 4294901760
    %1446 = vmatmul.mubr.f32.gmra.mrb[0].mxu0 %v1445
    %v1447 = vpop.f32.mrb[0].mxu0
    %v1448 = vadd.f32 %v1313, %v1447
    %v1449 = vpop.f32.mrb[0].mxu0
    %1450 = vmatprep.mubr.f32.mxu0 0.0
    %v1451 = vand.u32 %v798, 4294901760
    %1452 = vmatmul.mubr.f32.gmra.mrb[0].mxu0 %v1451
    %v1453 = vpop.f32.mrb[0].mxu0
    %v1454 = vadd.f32 %v1321, %v1453
    %v1455 = vpop.f32.mrb[0].mxu0
    %1456 = vmatprep.mubr.f32.mxu0 0.0
    %v1457 = vand.u32 %v801, 4294901760
    %1458 = vmatmul.mubr.f32.gmra.mrb[0].mxu0 %v1457
    %v1459 = vpop.f32.mrb[0].mxu0
    %v1460 = vadd.f32 %v1329, %v1459
    %v1461 = vpop.f32.mrb[0].mxu0
    %1462 = vmatprep.mubr.f32.mxu0 0.0
    %v1463 = vand.u32 %v804, 4294901760
    %1464 = vmatmul.mubr.f32.gmra.mrb[0].mxu0 %v1463
    %v1465 = vpop.f32.mrb[0].mxu0
    %v1466 = vadd.f32 %v1337, %v1465
    %v1467 = vpop.f32.mrb[0].mxu0
    %1468 = vmatprep.mubr.f32.mxu0 0.0
    %v1469 = vand.u32 %v807, 4294901760
    %1470 = vmatmul.mubr.f32.gmra.mrb[0].mxu0 %v1469
    %v1471 = vpop.f32.mrb[0].mxu0
    %v1472 = vadd.f32 %v1345, %v1471
    %v1473 = vpop.f32.mrb[0].mxu0
    %1474 = vmatprep.mubr.f32.mxu0 0.0
    %v1475 = vand.u32 %v810, 4294901760
    %1476 = vmatmul.mubr.f32.gmra.mrb[0].mxu0 %v1475
    %v1477 = vpop.f32.mrb[0].mxu0
    %v1478 = vadd.f32 %v1353, %v1477
    %v1479 = vpop.f32.mrb[0].mxu0
    %1480 = vdwg.mxu0
    %1481 = vmatprep.subr.mxu0 0.0
    %v1482 = vand.u32 %v784, 4294901760
    %1483 = vmatpush1.msra.mxu0 %v1482
    %1484 = vmatprep.subr.mxu0 0.0
    %v1485 = vand.u32 %v785, 4294901760
    %1486 = vmatpush1.msra.mxu0 %v1485
    %1487 = vmatprep.subr.mxu0 0.0
    %v1488 = vand.u32 %v786, 4294901760
    %1489 = vmatpush1.msra.mxu0 %v1488
    %1490 = vmatprep.subr.mxu0 0.0
    %v1491 = vand.u32 %v787, 4294901760
    %1492 = vmatpush1.msra.mxu0 %v1491
    %1493 = vmatprep.subr.mxu0 0.0
    %1494 = vmatpush1.msra.mxu0 0.0
    %1495 = vmatprep.subr.mxu0 0.0
    %1496 = vmatpush1.msra.mxu0 0.0
    %1497 = vmatprep.subr.mxu0 0.0
    %1498 = vmatpush1.msra.mxu0 0.0
    %1499 = vmatprep.subr.mxu0 0.0
    %1500 = vmatpush1.msra.mxu0 0.0
    %1501 = vmatprep.subr.mxu0 0.0
    %1502 = vmatpush1.msra.mxu0 0.0
    %1503 = vmatprep.subr.mxu0 0.0
    %1504 = vmatpush1.msra.mxu0 0.0
    %1505 = vmatprep.subr.mxu0 0.0
    %1506 = vmatpush1.msra.mxu0 0.0
    %1507 = vmatprep.subr.mxu0 0.0
    %1508 = vmatpush1.msra.mxu0 0.0
    %1509 = vmatprep.subr.mxu0 0.0
    %1510 = vmatpush1.msra.mxu0 0.0
    %1511 = vmatprep.subr.mxu0 0.0
    %1512 = vmatpush1.msra.mxu0 0.0
    %1513 = vmatprep.subr.mxu0 0.0
    %1514 = vmatpush1.msra.mxu0 0.0
    %1515 = vmatprep.subr.mxu0 0.0
    %1516 = vmatpush1.msra.mxu0 0.0
    %1517 = vmatprep.subr.mxu0 0.0
    %1518 = vmatpush1.msra.mxu0 0.0
    %1519 = vmatprep.subr.mxu0 0.0
    %1520 = vmatpush1.msra.mxu0 0.0
    %1521 = vmatprep.subr.mxu0 0.0
    %1522 = vmatpush1.msra.mxu0 0.0
    %1523 = vmatprep.subr.mxu0 0.0
    %1524 = vmatpush1.msra.mxu0 0.0
    %1525 = vmatprep.subr.mxu0 0.0
    %1526 = vmatpush1.msra.mxu0 0.0
    %1527 = vmatprep.subr.mxu0 0.0
    %1528 = vmatpush1.msra.mxu0 0.0
    %1529 = vmatprep.subr.mxu0 0.0
    %1530 = vmatpush1.msra.mxu0 0.0
    %1531 = vmatprep.subr.mxu0 0.0
    %1532 = vmatpush1.msra.mxu0 0.0
    %1533 = vmatprep.subr.mxu0 0.0
    %1534 = vmatpush1.msra.mxu0 0.0
    %1535 = vmatprep.subr.mxu0 0.0
    %1536 = vmatpush1.msra.mxu0 0.0
    %1537 = vmatprep.subr.mxu0 0.0
    %1538 = vmatpush1.msra.mxu0 0.0
    %1539 = vmatprep.subr.mxu0 0.0
    %1540 = vmatpush1.msra.mxu0 0.0
    %1541 = vmatprep.subr.mxu0 0.0
    %1542 = vmatpush1.msra.mxu0 0.0
    %1543 = vmatprep.subr.mxu0 0.0
    %1544 = vmatpush1.msra.mxu0 0.0
    %1545 = vmatprep.subr.mxu0 0.0
    %1546 = vmatpush1.msra.mxu0 0.0
    %1547 = vmatprep.subr.mxu0 0.0
    %1548 = vmatpush1.msra.mxu0 0.0
    %1549 = vmatprep.mubr.f32.mxu0 0.0
    %v1550 = vand.u32 %v789, 4294901760
    %1551 = vmatmul.mubr.f32.gmra.mrb[0].mxu0 %v1550
    %v1552 = vpop.f32.mrb[0].mxu0
    %v1553 = vadd.f32 %v1436, %v1552
    %v1554 = vpop.f32.mrb[0].mxu0
    %1555 = vmatprep.mubr.f32.mxu0 0.0
    %v1556 = vand.u32 %v792, 4294901760
    %1557 = vmatmul.mubr.f32.gmra.mrb[0].mxu0 %v1556
    %v1558 = vpop.f32.mrb[0].mxu0
    %v1559 = vadd.f32 %v1442, %v1558
    %v1560 = vpop.f32.mrb[0].mxu0
    %1561 = vmatprep.mubr.f32.mxu0 0.0
    %v1562 = vand.u32 %v795, 4294901760
    %1563 = vmatmul.mubr.f32.gmra.mrb[0].mxu0 %v1562
    %v1564 = vpop.f32.mrb[0].mxu0
    %v1565 = vadd.f32 %v1448, %v1564
    %v1566 = vpop.f32.mrb[0].mxu0
    %1567 = vmatprep.mubr.f32.mxu0 0.0
    %v1568 = vand.u32 %v798, 4294901760
    %1569 = vmatmul.mubr.f32.gmra.mrb[0].mxu0 %v1568
    %v1570 = vpop.f32.mrb[0].mxu0
    %v1571 = vadd.f32 %v1454, %v1570
    %v1572 = vpop.f32.mrb[0].mxu0
    %1573 = vmatprep.mubr.f32.mxu0 0.0
    %v1574 = vand.u32 %v801, 4294901760
    %1575 = vmatmul.mubr.f32.gmra.mrb[0].mxu0 %v1574
    %v1576 = vpop.f32.mrb[0].mxu0
    %v1577 = vadd.f32 %v1460, %v1576
    %v1578 = vpop.f32.mrb[0].mxu0
    %1579 = vmatprep.mubr.f32.mxu0 0.0
    %v1580 = vand.u32 %v804, 4294901760
    %1581 = vmatmul.mubr.f32.gmra.mrb[0].mxu0 %v1580
    %v1582 = vpop.f32.mrb[0].mxu0
    %v1583 = vadd.f32 %v1466, %v1582
    %v1584 = vpop.f32.mrb[0].mxu0
    %1585 = vmatprep.mubr.f32.mxu0 0.0
    %v1586 = vand.u32 %v807, 4294901760
    %1587 = vmatmul.mubr.f32.gmra.mrb[0].mxu0 %v1586
    %v1588 = vpop.f32.mrb[0].mxu0
    %v1589 = vadd.f32 %v1472, %v1588
    %v1590 = vpop.f32.mrb[0].mxu0
    %1591 = vmatprep.mubr.f32.mxu0 0.0
    %v1592 = vand.u32 %v810, 4294901760
    %1593 = vmatmul.mubr.f32.gmra.mrb[0].mxu0 %v1592
    %v1594 = vpop.f32.mrb[0].mxu0
    %v1595 = vadd.f32 %v1478, %v1594
    %v1596 = vpop.f32.mrb[0].mxu0
    %1597 = vdwg.mxu0
    %1598 = vst.msk [vmem:[%s3] sm:$0xff] %vm63, %v1553
    %1599 = vst.msk [vmem:[%s3 + $0x8] sm:$0xff] %vm63, %v1559
    %1600 = vst.msk [vmem:[%s3 + $0x10] sm:$0xff] %vm63, %v1565
    %1601 = vst.msk [vmem:[%s3 + $0x18] sm:$0xff] %vm63, %v1571
    %1602 = vst.msk [vmem:[%s3 + $0x20] sm:$0xff] %vm63, %v1577
    %1603 = vst.msk [vmem:[%s3 + $0x28] sm:$0xff] %vm63, %v1583
    %1604 = vst.msk [vmem:[%s3 + $0x30] sm:$0xff] %vm63, %v1589
    %1605 = vst.msk [vmem:[%s3 + $0x38] sm:$0xff] %vm63, %v1595
    // Predicated region
    $region26: #{tpu_custom_call.1} parent=1 // pred_check
      _
    $region27: #{tpu_custom_call.1} parent=1 // pred_check_branch
      %1607 = sbr.rel (0) target = $region29
    $region28: #{tpu_custom_call.1} parent=1 // pred_region
      _
    $region29: #{tpu_custom_call.1} parent=1 // pred_fallthru
      _
    // Predicated region
    $region30: #{tpu_custom_call.1} parent=1 // pred_check
      _
    $region31: #{tpu_custom_call.1} parent=1 // pred_check_branch
      %1609 = sbr.rel (0) target = $region33
    $region32: #{tpu_custom_call.1} parent=1 // pred_region
      _
    $region33: #{tpu_custom_call.1} parent=1 // pred_fallthru
      _
    %1610 = vsyncpa [#allocation5], 1
    %1611 = vsyncpa [#allocation7], 1

</llo_original>
